<compile_context>
chip_gen: v7x
topology: tpu7x:2x2x1
jax: 0.10.0
libtpu: 0.0.40
codegen_flags: <defaults>
</compile_context>

<pallas_src>
import jax
import jax.numpy as jnp
from jax.experimental import pallas as pl
from jax.experimental.pallas import tpu as pltpu

N_EMBD = 64
N_HEAD = 4
HEAD_SIZE = N_EMBD // N_HEAD   # 16
BLOCK_SIZE = 32                # max seq length (causal mask buffer size)
LN_EPS = 1e-5
MASK_NEG = -1e9                # large-negative finite (safer than -inf)


def block_kernel(x_ref, mask_ref,
                 wqkv_ref, bqkv_ref,
                 wproj_ref, bproj_ref,
                 w1_ref, b1_ref, w2_ref, b2_ref,
                 out_ref):
    bsz, T, C = x_ref.shape            # bb batch elements per grid step
    M = bsz * T
    x = x_ref[...].reshape(M, C)       # fused row matrix for all projections

    def norm(v):                       # gamma/beta already folded into weights
        mu = jnp.mean(v, axis=-1, keepdims=True)
        var = jnp.mean((v - mu) ** 2, axis=-1, keepdims=True)
        return (v - mu) * jax.lax.rsqrt(var + LN_EPS)

    # ---- self-attention branch -------------------------------------------
    xn = norm(x)
    qkv = jnp.dot(xn, wqkv_ref[...],
                  preferred_element_type=jnp.float32) + bqkv_ref[...]   # (M, 3C)
    q = qkv[:, 0 * C:1 * C].reshape(bsz, T, C)
    k = qkv[:, 1 * C:2 * C].reshape(bsz, T, C)
    v = qkv[:, 2 * C:3 * C].reshape(bsz, T, C)

    # NOTE: tinyNanoGPT's Head scales by C**-0.5 (C = n_embd), not head_size**-0.5.
    scale = 1.0 / (C ** 0.5)
    bias = mask_ref[...]               # (T, T): 0 on/below diag, -1e9 above
    wproj = wproj_ref[...]             # (C, C)

    sa = jnp.zeros((M, C), jnp.float32)
    for h in range(N_HEAD):            # static 4-iteration loop; matmuls are
        s = h * HEAD_SIZE              # batched over bb via 3-D einsum
        qh = q[:, :, s:s + HEAD_SIZE]
        kh = k[:, :, s:s + HEAD_SIZE]
        vh = v[:, :, s:s + HEAD_SIZE]
        wei = jnp.einsum('btd,bsd->bts', qh, kh,
                         preferred_element_type=jnp.float32) * scale + bias
        wei = wei - jnp.max(wei, axis=-1, keepdims=True)
        e = jnp.exp(wei)               # masked entries underflow to exactly 0
        p = e / jnp.sum(e, axis=-1, keepdims=True)
        oh = jnp.einsum('bts,bsd->btd', p, vh,
                        preferred_element_type=jnp.float32)            # (bb,T,D)
        # Accumulate through this head's row-block of the output projection —
        # avoids concatenating 4x 16-lane pieces.
        sa = sa + jnp.dot(oh.reshape(M, HEAD_SIZE), wproj[s:s + HEAD_SIZE, :],
                          preferred_element_type=jnp.float32)
    sa = sa + bproj_ref[...]
    x1 = x + sa                                                        # residual

    # ---- feed-forward branch ---------------------------------------------
    x2n = norm(x1)
    h1 = jnp.dot(x2n, w1_ref[...], preferred_element_type=jnp.float32) + b1_ref[...]
    h1 = jnp.maximum(h1, 0.0)                                          # ReLU
    ff = jnp.dot(h1, w2_ref[...], preferred_element_type=jnp.float32) + b2_ref[...]

    out_ref[...] = (x1 + ff).reshape(bsz, T, C).astype(out_ref.dtype)  # residual
    # TODO(synk): dropout (p=0.0 in the module) is a no-op and is omitted.


def make_params(key):
    ks = jax.random.split(key, 13)
    std = 0.02
    return dict(
        ln1_g=1.0 + 0.1 * jax.random.normal(ks[0], (1, N_EMBD), jnp.float32),
        ln1_b=0.1 * jax.random.normal(ks[1], (1, N_EMBD), jnp.float32),
        wq=std * jax.random.normal(ks[2], (N_EMBD, N_EMBD), jnp.float32),
        wk=std * jax.random.normal(ks[3], (N_EMBD, N_EMBD), jnp.float32),
        wv=std * jax.random.normal(ks[4], (N_EMBD, N_EMBD), jnp.float32),
        wproj=std * jax.random.normal(ks[5], (N_EMBD, N_EMBD), jnp.float32),
        bproj=std * jax.random.normal(ks[6], (1, N_EMBD), jnp.float32),
        ln2_g=1.0 + 0.1 * jax.random.normal(ks[7], (1, N_EMBD), jnp.float32),
        ln2_b=0.1 * jax.random.normal(ks[8], (1, N_EMBD), jnp.float32),
        w1=std * jax.random.normal(ks[9], (N_EMBD, 4 * N_EMBD), jnp.float32),
        b1=std * jax.random.normal(ks[10], (1, 4 * N_EMBD), jnp.float32),
        w2=std * jax.random.normal(ks[11], (4 * N_EMBD, N_EMBD), jnp.float32),
        b2=std * jax.random.normal(ks[12], (1, N_EMBD), jnp.float32),
    )


def fold_params(p):
    """Fold LN gamma/beta into the following projections; fuse QKV weights.

    LN(x) @ W = norm(x) @ (diag(g) @ W) + b @ W   (exact up to FP reassociation)
    """
    g1, be1 = p['ln1_g'][0], p['ln1_b'][0]
    g2, be2 = p['ln2_g'][0], p['ln2_b'][0]
    wq, wk, wv = p['wq'], p['wk'], p['wv']
    w_qkv = jnp.concatenate(
        [g1[:, None] * wq, g1[:, None] * wk, g1[:, None] * wv], axis=1)     # (C, 3C)
    b_qkv = jnp.concatenate([be1 @ wq, be1 @ wk, be1 @ wv])[None, :]        # (1, 3C)
    w1f = g2[:, None] * p['w1']                                             # (C, 4C)
    b1f = (p['b1'][0] + be2 @ p['w1'])[None, :]                             # (1, 4C)
    return dict(w_qkv=w_qkv, b_qkv=b_qkv,
                wproj=p['wproj'], bproj=p['bproj'],
                w1=w1f, b1=b1f, w2=p['w2'], b2=p['b2'])


def block_forward(x, p, *, bb=None):
    B, T, C = x.shape
    assert C == N_EMBD and T <= BLOCK_SIZE

    # --- choose batch-block so each grid step works on ~2048 fused rows ----
    if bb is None:
        bb = max(1, min(B, 2048 // T))
        if bb == B and B >= 2:          # >= 2 grid steps so both cores get work
            bb = pl.cdiv(B, 2)
    nb = pl.cdiv(B, bb)
    Bp = nb * bb
    if Bp != B:                         # pad batch to a multiple of bb
        x = jnp.pad(x, ((0, Bp - B), (0, 0), (0, 0)))

    fp = fold_params(p)
    # additive causal bias (0 below/on diag, -1e9 above) — hoisted out of kernel
    tril = jnp.tril(jnp.ones((T, T), bool))
    mask = jnp.where(tril, 0.0, MASK_NEG).astype(jnp.float32)

    def full_spec(shape):
        return pl.BlockSpec(shape, lambda b: (0,) * len(shape))

    in_specs = [
        pl.BlockSpec((bb, T, C), lambda b: (b, 0, 0)),   # x
        full_spec(mask.shape),
        full_spec(fp['w_qkv'].shape), full_spec(fp['b_qkv'].shape),
        full_spec(fp['wproj'].shape), full_spec(fp['bproj'].shape),
        full_spec(fp['w1'].shape), full_spec(fp['b1'].shape),
        full_spec(fp['w2'].shape), full_spec(fp['b2'].shape),
    ]

    out = pl.pallas_call(
        block_kernel,
        out_shape=jax.ShapeDtypeStruct((Bp, T, C), x.dtype),
        grid_spec=pltpu.PrefetchScalarGridSpec(
            num_scalar_prefetch=0,
            grid=(nb,),
            in_specs=in_specs,
            out_specs=pl.BlockSpec((bb, T, C), lambda b: (b, 0, 0)),
        ),
        compiler_params=pltpu.CompilerParams(
            dimension_semantics=("parallel",)),
    )(x, mask, fp['w_qkv'], fp['b_qkv'], fp['wproj'], fp['bproj'],
      fp['w1'], fp['b1'], fp['w2'], fp['b2'])

    return out[:B]


def block_forward_ref(x, p):
    """Pure-JAX reference for correctness checking (matches the PyTorch Block)."""
    def layernorm(v, g, b):
        mu = jnp.mean(v, axis=-1, keepdims=True)
        var = jnp.mean((v - mu) ** 2, axis=-1, keepdims=True)
        return (v - mu) * jax.lax.rsqrt(var + LN_EPS) * g + b

    B, T, C = x.shape
    xn = layernorm(x, p['ln1_g'][0], p['ln1_b'][0])
    q = xn @ p['wq']
    k = xn @ p['wk']
    v = xn @ p['wv']
    qh = q.reshape(B, T, N_HEAD, HEAD_SIZE).transpose(0, 2, 1, 3)
    kh = k.reshape(B, T, N_HEAD, HEAD_SIZE).transpose(0, 2, 1, 3)
    vh = v.reshape(B, T, N_HEAD, HEAD_SIZE).transpose(0, 2, 1, 3)
    wei = jnp.einsum('bhqd,bhkd->bhqk', qh, kh) * (C ** -0.5)
    mask = jnp.tril(jnp.ones((T, T), bool))
    wei = jnp.where(mask, wei, -jnp.inf)
    wei = jax.nn.softmax(wei, axis=-1)
    out = jnp.einsum('bhqk,bhkd->bhqd', wei, vh)
    out = out.transpose(0, 2, 1, 3).reshape(B, T, C)
    sa = out @ p['wproj'] + p['bproj'][0]
    x1 = x + sa
    x2n = layernorm(x1, p['ln2_g'][0], p['ln2_b'][0])
    ff = jnp.maximum(x2n @ p['w1'] + p['b1'][0], 0.0) @ p['w2'] + p['b2'][0]
    return x1 + ff


if __name__ == "__main__":
    key = jax.random.PRNGKey(0)
    k_x, k_p = jax.random.split(key)
    B, T, C = 2, 8, N_EMBD
    x = jax.random.normal(k_x, (B, T, C), jnp.float32)
    params = make_params(k_p)

    y = block_forward(x, params)
    jax.block_until_ready(y)

    y_ref = block_forward_ref(x, params)
    assert jnp.allclose(y, y_ref, atol=1e-3, rtol=1e-3), "mismatch vs reference"

    print("KERNEL_OK")
</pallas_src>

<mosaic_0001>
module attributes {stable_mosaic.version = 11 : i64} {
  func.func @block_kernel(%arg0: i32, %arg1: memref<1x8x64xf32, #tpu.memory_space<vmem>>, %arg2: memref<8x8xf32, #tpu.memory_space<vmem>>, %arg3: memref<64x192xf32, #tpu.memory_space<vmem>>, %arg4: memref<1x192xf32, #tpu.memory_space<vmem>>, %arg5: memref<64x64xf32, #tpu.memory_space<vmem>>, %arg6: memref<1x64xf32, #tpu.memory_space<vmem>>, %arg7: memref<64x256xf32, #tpu.memory_space<vmem>>, %arg8: memref<1x256xf32, #tpu.memory_space<vmem>>, %arg9: memref<256x64xf32, #tpu.memory_space<vmem>>, %arg10: memref<1x64xf32, #tpu.memory_space<vmem>>, %arg11: memref<1x8x64xf32, #tpu.memory_space<vmem>>) attributes {dimension_semantics = [#tpu.dimension_semantics<parallel>], iteration_bounds = array<i64: 2>, scalar_prefetch = 0 : i64, scratch_operands = 0 : i64, tpu.core_type = #tpu.core_type<tc>, window_params = [{transform_indices = @transform_0, window_bounds = array<i64: 1, 8, 64>}, {pipeline_mode = #tpu.pipeline_mode<synchronous>, transform_indices = @transform_1, window_bounds = array<i64: 8, 8>}, {pipeline_mode = #tpu.pipeline_mode<synchronous>, transform_indices = @transform_2, window_bounds = array<i64: 64, 192>}, {pipeline_mode = #tpu.pipeline_mode<synchronous>, transform_indices = @transform_3, window_bounds = array<i64: 1, 192>}, {pipeline_mode = #tpu.pipeline_mode<synchronous>, transform_indices = @transform_4, window_bounds = array<i64: 64, 64>}, {pipeline_mode = #tpu.pipeline_mode<synchronous>, transform_indices = @transform_5, window_bounds = array<i64: 1, 64>}, {pipeline_mode = #tpu.pipeline_mode<synchronous>, transform_indices = @transform_6, window_bounds = array<i64: 64, 256>}, {pipeline_mode = #tpu.pipeline_mode<synchronous>, transform_indices = @transform_7, window_bounds = array<i64: 1, 256>}, {pipeline_mode = #tpu.pipeline_mode<synchronous>, transform_indices = @transform_8, window_bounds = array<i64: 256, 64>}, {pipeline_mode = #tpu.pipeline_mode<synchronous>, transform_indices = @transform_9, window_bounds = array<i64: 1, 64>}, {transform_indices = @transform_10, window_bounds = array<i64: 1, 8, 64>}]} {
    %c0 = arith.constant 0 : index
    %c0_0 = arith.constant 0 : index
    %c0_1 = arith.constant 0 : index
    %0 = vector.load %arg1[%c0, %c0_0, %c0_1] : memref<1x8x64xf32, #tpu.memory_space<vmem>>, vector<1x8x64xf32>
    %1 = vector.shape_cast %0 : vector<1x8x64xf32> to vector<8x64xf32>
    %cst = arith.constant dense<0.000000e+00> : vector<8xf32>
    %2 = vector.multi_reduction <add>, %1, %cst [1] : vector<8x64xf32> to vector<8xf32>
    %3 = vector.shape_cast %2 : vector<8xf32> to vector<8x1xf32>
    %cst_2 = arith.constant 6.400000e+01 : f32
    %4 = vector.broadcast %cst_2 : f32 to vector<8x1xf32>
    %5 = arith.divf %3, %4 : vector<8x1xf32>
    %6 = vector.broadcast %5 : vector<8x1xf32> to vector<8x64xf32>
    %7 = arith.subf %1, %6 : vector<8x64xf32>
    %8 = arith.mulf %7, %7 : vector<8x64xf32>
    %cst_3 = arith.constant dense<0.000000e+00> : vector<8xf32>
    %9 = vector.multi_reduction <add>, %8, %cst_3 [1] : vector<8x64xf32> to vector<8xf32>
    %10 = vector.shape_cast %9 : vector<8xf32> to vector<8x1xf32>
    %cst_4 = arith.constant 6.400000e+01 : f32
    %11 = vector.broadcast %cst_4 : f32 to vector<8x1xf32>
    %12 = arith.divf %10, %11 : vector<8x1xf32>
    %13 = vector.broadcast %5 : vector<8x1xf32> to vector<8x64xf32>
    %14 = arith.subf %1, %13 : vector<8x64xf32>
    %cst_5 = arith.constant 9.99999974E-6 : f32
    %15 = vector.broadcast %cst_5 : f32 to vector<8x1xf32>
    %16 = arith.addf %12, %15 : vector<8x1xf32>
    %17 = math.rsqrt %16 : vector<8x1xf32>
    %18 = vector.broadcast %17 : vector<8x1xf32> to vector<8x64xf32>
    %19 = arith.mulf %14, %18 : vector<8x64xf32>
    %c0_6 = arith.constant 0 : index
    %c0_7 = arith.constant 0 : index
    %20 = vector.load %arg3[%c0_6, %c0_7] : memref<64x192xf32, #tpu.memory_space<vmem>>, vector<64x192xf32>
    %cst_8 = arith.constant dense<0.000000e+00> : vector<8x192xf32>
    %21 = tpu.matmul %19, %20, %cst_8 {dimension_numbers = #tpu.dot_dimension_numbers<[1], [0], [0], [1], [0, 0, 1, 1], [], []>} : vector<8x64xf32>, vector<64x192xf32>, vector<8x192xf32> -> vector<8x192xf32>
    %c0_9 = arith.constant 0 : index
    %c0_10 = arith.constant 0 : index
    %22 = vector.load %arg4[%c0_9, %c0_10] : memref<1x192xf32, #tpu.memory_space<vmem>>, vector<1x192xf32>
    %23 = vector.broadcast %22 : vector<1x192xf32> to vector<8x192xf32>
    %24 = arith.addf %21, %23 : vector<8x192xf32>
    %25 = vector.extract_strided_slice %24 {offsets = [0, 0], sizes = [8, 64], strides = [1, 1]} : vector<8x192xf32> to vector<8x64xf32>
    %26 = vector.shape_cast %25 : vector<8x64xf32> to vector<1x8x64xf32>
    %27 = vector.extract_strided_slice %24 {offsets = [0, 64], sizes = [8, 64], strides = [1, 1]} : vector<8x192xf32> to vector<8x64xf32>
    %28 = vector.shape_cast %27 : vector<8x64xf32> to vector<1x8x64xf32>
    %29 = vector.extract_strided_slice %24 {offsets = [0, 128], sizes = [8, 64], strides = [1, 1]} : vector<8x192xf32> to vector<8x64xf32>
    %30 = vector.shape_cast %29 : vector<8x64xf32> to vector<1x8x64xf32>
    %c0_11 = arith.constant 0 : index
    %c0_12 = arith.constant 0 : index
    %31 = vector.load %arg2[%c0_11, %c0_12] : memref<8x8xf32, #tpu.memory_space<vmem>>, vector<8x8xf32>
    %c0_13 = arith.constant 0 : index
    %c0_14 = arith.constant 0 : index
    %32 = vector.load %arg5[%c0_13, %c0_14] : memref<64x64xf32, #tpu.memory_space<vmem>>, vector<64x64xf32>
    %cst_15 = arith.constant 0.000000e+00 : f32
    %33 = vector.broadcast %cst_15 : f32 to vector<8x64xf32>
    %34 = vector.extract_strided_slice %26 {offsets = [0, 0, 0], sizes = [1, 8, 16], strides = [1, 1, 1]} : vector<1x8x64xf32> to vector<1x8x16xf32>
    %35 = vector.extract_strided_slice %28 {offsets = [0, 0, 0], sizes = [1, 8, 16], strides = [1, 1, 1]} : vector<1x8x64xf32> to vector<1x8x16xf32>
    %36 = vector.extract_strided_slice %30 {offsets = [0, 0, 0], sizes = [1, 8, 16], strides = [1, 1, 1]} : vector<1x8x64xf32> to vector<1x8x16xf32>
    "tpu.trace_start"() <{level = 10 : i32, message = "btd,bsd->bts"}> : () -> ()
    %cst_16 = arith.constant dense<0.000000e+00> : vector<1x8x8xf32>
    %37 = tpu.matmul %34, %35, %cst_16 {dimension_numbers = #tpu.dot_dimension_numbers<[2], [2], [1], [1], [0, 0, 0, 1, 1, 1], [0], [0]>} : vector<1x8x16xf32>, vector<1x8x16xf32>, vector<1x8x8xf32> -> vector<1x8x8xf32>
    "tpu.trace_stop"() : () -> ()
    %cst_17 = arith.constant 1.250000e-01 : f32
    %38 = vector.broadcast %cst_17 : f32 to vector<1x8x8xf32>
    %39 = arith.mulf %37, %38 : vector<1x8x8xf32>
    %40 = vector.shape_cast %31 : vector<8x8xf32> to vector<1x8x8xf32>
    %41 = arith.addf %39, %40 : vector<1x8x8xf32>
    %cst_18 = arith.constant dense<0xFF800000> : vector<1x8xf32>
    %42 = vector.multi_reduction <maximumf>, %41, %cst_18 [2] : vector<1x8x8xf32> to vector<1x8xf32>
    %43 = vector.shape_cast %42 : vector<1x8xf32> to vector<1x8x1xf32>
    %44 = vector.broadcast %43 : vector<1x8x1xf32> to vector<1x8x8xf32>
    %45 = arith.subf %41, %44 : vector<1x8x8xf32>
    %46 = math.exp %45 : vector<1x8x8xf32>
    %cst_19 = arith.constant dense<0.000000e+00> : vector<1x8xf32>
    %47 = vector.multi_reduction <add>, %46, %cst_19 [2] : vector<1x8x8xf32> to vector<1x8xf32>
    %48 = vector.shape_cast %47 : vector<1x8xf32> to vector<1x8x1xf32>
    %49 = vector.broadcast %48 : vector<1x8x1xf32> to vector<1x8x8xf32>
    %50 = arith.divf %46, %49 : vector<1x8x8xf32>
    "tpu.trace_start"() <{level = 10 : i32, message = "bts,bsd->btd"}> : () -> ()
    %cst_20 = arith.constant dense<0.000000e+00> : vector<1x8x16xf32>
    %51 = tpu.matmul %50, %36, %cst_20 {dimension_numbers = #tpu.dot_dimension_numbers<[2], [1], [1], [2], [0, 0, 0, 1, 1, 2], [0], [0]>} : vector<1x8x8xf32>, vector<1x8x16xf32>, vector<1x8x16xf32> -> vector<1x8x16xf32>
    "tpu.trace_stop"() : () -> ()
    %52 = vector.shape_cast %51 : vector<1x8x16xf32> to vector<8x16xf32>
    %53 = vector.extract_strided_slice %32 {offsets = [0, 0], sizes = [16, 64], strides = [1, 1]} : vector<64x64xf32> to vector<16x64xf32>
    %cst_21 = arith.constant dense<0.000000e+00> : vector<8x64xf32>
    %54 = tpu.matmul %52, %53, %cst_21 {dimension_numbers = #tpu.dot_dimension_numbers<[1], [0], [0], [1], [0, 0, 1, 1], [], []>} : vector<8x16xf32>, vector<16x64xf32>, vector<8x64xf32> -> vector<8x64xf32>
    %55 = arith.addf %33, %54 : vector<8x64xf32>
    %56 = vector.extract_strided_slice %26 {offsets = [0, 0, 16], sizes = [1, 8, 16], strides = [1, 1, 1]} : vector<1x8x64xf32> to vector<1x8x16xf32>
    %57 = vector.extract_strided_slice %28 {offsets = [0, 0, 16], sizes = [1, 8, 16], strides = [1, 1, 1]} : vector<1x8x64xf32> to vector<1x8x16xf32>
    %58 = vector.extract_strided_slice %30 {offsets = [0, 0, 16], sizes = [1, 8, 16], strides = [1, 1, 1]} : vector<1x8x64xf32> to vector<1x8x16xf32>
    "tpu.trace_start"() <{level = 10 : i32, message = "btd,bsd->bts"}> : () -> ()
    %cst_22 = arith.constant dense<0.000000e+00> : vector<1x8x8xf32>
    %59 = tpu.matmul %56, %57, %cst_22 {dimension_numbers = #tpu.dot_dimension_numbers<[2], [2], [1], [1], [0, 0, 0, 1, 1, 1], [0], [0]>} : vector<1x8x16xf32>, vector<1x8x16xf32>, vector<1x8x8xf32> -> vector<1x8x8xf32>
    "tpu.trace_stop"() : () -> ()
    %cst_23 = arith.constant 1.250000e-01 : f32
    %60 = vector.broadcast %cst_23 : f32 to vector<1x8x8xf32>
    %61 = arith.mulf %59, %60 : vector<1x8x8xf32>
    %62 = vector.shape_cast %31 : vector<8x8xf32> to vector<1x8x8xf32>
    %63 = arith.addf %61, %62 : vector<1x8x8xf32>
    %cst_24 = arith.constant dense<0xFF800000> : vector<1x8xf32>
    %64 = vector.multi_reduction <maximumf>, %63, %cst_24 [2] : vector<1x8x8xf32> to vector<1x8xf32>
    %65 = vector.shape_cast %64 : vector<1x8xf32> to vector<1x8x1xf32>
    %66 = vector.broadcast %65 : vector<1x8x1xf32> to vector<1x8x8xf32>
    %67 = arith.subf %63, %66 : vector<1x8x8xf32>
    %68 = math.exp %67 : vector<1x8x8xf32>
    %cst_25 = arith.constant dense<0.000000e+00> : vector<1x8xf32>
    %69 = vector.multi_reduction <add>, %68, %cst_25 [2] : vector<1x8x8xf32> to vector<1x8xf32>
    %70 = vector.shape_cast %69 : vector<1x8xf32> to vector<1x8x1xf32>
    %71 = vector.broadcast %70 : vector<1x8x1xf32> to vector<1x8x8xf32>
    %72 = arith.divf %68, %71 : vector<1x8x8xf32>
    "tpu.trace_start"() <{level = 10 : i32, message = "bts,bsd->btd"}> : () -> ()
    %cst_26 = arith.constant dense<0.000000e+00> : vector<1x8x16xf32>
    %73 = tpu.matmul %72, %58, %cst_26 {dimension_numbers = #tpu.dot_dimension_numbers<[2], [1], [1], [2], [0, 0, 0, 1, 1, 2], [0], [0]>} : vector<1x8x8xf32>, vector<1x8x16xf32>, vector<1x8x16xf32> -> vector<1x8x16xf32>
    "tpu.trace_stop"() : () -> ()
    %74 = vector.shape_cast %73 : vector<1x8x16xf32> to vector<8x16xf32>
    %75 = vector.extract_strided_slice %32 {offsets = [16, 0], sizes = [16, 64], strides = [1, 1]} : vector<64x64xf32> to vector<16x64xf32>
    %cst_27 = arith.constant dense<0.000000e+00> : vector<8x64xf32>
    %76 = tpu.matmul %74, %75, %cst_27 {dimension_numbers = #tpu.dot_dimension_numbers<[1], [0], [0], [1], [0, 0, 1, 1], [], []>} : vector<8x16xf32>, vector<16x64xf32>, vector<8x64xf32> -> vector<8x64xf32>
    %77 = arith.addf %55, %76 : vector<8x64xf32>
    %78 = vector.extract_strided_slice %26 {offsets = [0, 0, 32], sizes = [1, 8, 16], strides = [1, 1, 1]} : vector<1x8x64xf32> to vector<1x8x16xf32>
    %79 = vector.extract_strided_slice %28 {offsets = [0, 0, 32], sizes = [1, 8, 16], strides = [1, 1, 1]} : vector<1x8x64xf32> to vector<1x8x16xf32>
    %80 = vector.extract_strided_slice %30 {offsets = [0, 0, 32], sizes = [1, 8, 16], strides = [1, 1, 1]} : vector<1x8x64xf32> to vector<1x8x16xf32>
    "tpu.trace_start"() <{level = 10 : i32, message = "btd,bsd->bts"}> : () -> ()
    %cst_28 = arith.constant dense<0.000000e+00> : vector<1x8x8xf32>
    %81 = tpu.matmul %78, %79, %cst_28 {dimension_numbers = #tpu.dot_dimension_numbers<[2], [2], [1], [1], [0, 0, 0, 1, 1, 1], [0], [0]>} : vector<1x8x16xf32>, vector<1x8x16xf32>, vector<1x8x8xf32> -> vector<1x8x8xf32>
    "tpu.trace_stop"() : () -> ()
    %cst_29 = arith.constant 1.250000e-01 : f32
    %82 = vector.broadcast %cst_29 : f32 to vector<1x8x8xf32>
    %83 = arith.mulf %81, %82 : vector<1x8x8xf32>
    %84 = vector.shape_cast %31 : vector<8x8xf32> to vector<1x8x8xf32>
    %85 = arith.addf %83, %84 : vector<1x8x8xf32>
    %cst_30 = arith.constant dense<0xFF800000> : vector<1x8xf32>
    %86 = vector.multi_reduction <maximumf>, %85, %cst_30 [2] : vector<1x8x8xf32> to vector<1x8xf32>
    %87 = vector.shape_cast %86 : vector<1x8xf32> to vector<1x8x1xf32>
    %88 = vector.broadcast %87 : vector<1x8x1xf32> to vector<1x8x8xf32>
    %89 = arith.subf %85, %88 : vector<1x8x8xf32>
    %90 = math.exp %89 : vector<1x8x8xf32>
    %cst_31 = arith.constant dense<0.000000e+00> : vector<1x8xf32>
    %91 = vector.multi_reduction <add>, %90, %cst_31 [2] : vector<1x8x8xf32> to vector<1x8xf32>
    %92 = vector.shape_cast %91 : vector<1x8xf32> to vector<1x8x1xf32>
    %93 = vector.broadcast %92 : vector<1x8x1xf32> to vector<1x8x8xf32>
    %94 = arith.divf %90, %93 : vector<1x8x8xf32>
    "tpu.trace_start"() <{level = 10 : i32, message = "bts,bsd->btd"}> : () -> ()
    %cst_32 = arith.constant dense<0.000000e+00> : vector<1x8x16xf32>
    %95 = tpu.matmul %94, %80, %cst_32 {dimension_numbers = #tpu.dot_dimension_numbers<[2], [1], [1], [2], [0, 0, 0, 1, 1, 2], [0], [0]>} : vector<1x8x8xf32>, vector<1x8x16xf32>, vector<1x8x16xf32> -> vector<1x8x16xf32>
    "tpu.trace_stop"() : () -> ()
    %96 = vector.shape_cast %95 : vector<1x8x16xf32> to vector<8x16xf32>
    %97 = vector.extract_strided_slice %32 {offsets = [32, 0], sizes = [16, 64], strides = [1, 1]} : vector<64x64xf32> to vector<16x64xf32>
    %cst_33 = arith.constant dense<0.000000e+00> : vector<8x64xf32>
    %98 = tpu.matmul %96, %97, %cst_33 {dimension_numbers = #tpu.dot_dimension_numbers<[1], [0], [0], [1], [0, 0, 1, 1], [], []>} : vector<8x16xf32>, vector<16x64xf32>, vector<8x64xf32> -> vector<8x64xf32>
    %99 = arith.addf %77, %98 : vector<8x64xf32>
    %100 = vector.extract_strided_slice %26 {offsets = [0, 0, 48], sizes = [1, 8, 16], strides = [1, 1, 1]} : vector<1x8x64xf32> to vector<1x8x16xf32>
    %101 = vector.extract_strided_slice %28 {offsets = [0, 0, 48], sizes = [1, 8, 16], strides = [1, 1, 1]} : vector<1x8x64xf32> to vector<1x8x16xf32>
    %102 = vector.extract_strided_slice %30 {offsets = [0, 0, 48], sizes = [1, 8, 16], strides = [1, 1, 1]} : vector<1x8x64xf32> to vector<1x8x16xf32>
    "tpu.trace_start"() <{level = 10 : i32, message = "btd,bsd->bts"}> : () -> ()
    %cst_34 = arith.constant dense<0.000000e+00> : vector<1x8x8xf32>
    %103 = tpu.matmul %100, %101, %cst_34 {dimension_numbers = #tpu.dot_dimension_numbers<[2], [2], [1], [1], [0, 0, 0, 1, 1, 1], [0], [0]>} : vector<1x8x16xf32>, vector<1x8x16xf32>, vector<1x8x8xf32> -> vector<1x8x8xf32>
    "tpu.trace_stop"() : () -> ()
    %cst_35 = arith.constant 1.250000e-01 : f32
    %104 = vector.broadcast %cst_35 : f32 to vector<1x8x8xf32>
    %105 = arith.mulf %103, %104 : vector<1x8x8xf32>
    %106 = vector.shape_cast %31 : vector<8x8xf32> to vector<1x8x8xf32>
    %107 = arith.addf %105, %106 : vector<1x8x8xf32>
    %cst_36 = arith.constant dense<0xFF800000> : vector<1x8xf32>
    %108 = vector.multi_reduction <maximumf>, %107, %cst_36 [2] : vector<1x8x8xf32> to vector<1x8xf32>
    %109 = vector.shape_cast %108 : vector<1x8xf32> to vector<1x8x1xf32>
    %110 = vector.broadcast %109 : vector<1x8x1xf32> to vector<1x8x8xf32>
    %111 = arith.subf %107, %110 : vector<1x8x8xf32>
    %112 = math.exp %111 : vector<1x8x8xf32>
    %cst_37 = arith.constant dense<0.000000e+00> : vector<1x8xf32>
    %113 = vector.multi_reduction <add>, %112, %cst_37 [2] : vector<1x8x8xf32> to vector<1x8xf32>
    %114 = vector.shape_cast %113 : vector<1x8xf32> to vector<1x8x1xf32>
    %115 = vector.broadcast %114 : vector<1x8x1xf32> to vector<1x8x8xf32>
    %116 = arith.divf %112, %115 : vector<1x8x8xf32>
    "tpu.trace_start"() <{level = 10 : i32, message = "bts,bsd->btd"}> : () -> ()
    %cst_38 = arith.constant dense<0.000000e+00> : vector<1x8x16xf32>
    %117 = tpu.matmul %116, %102, %cst_38 {dimension_numbers = #tpu.dot_dimension_numbers<[2], [1], [1], [2], [0, 0, 0, 1, 1, 2], [0], [0]>} : vector<1x8x8xf32>, vector<1x8x16xf32>, vector<1x8x16xf32> -> vector<1x8x16xf32>
    "tpu.trace_stop"() : () -> ()
    %118 = vector.shape_cast %117 : vector<1x8x16xf32> to vector<8x16xf32>
    %119 = vector.extract_strided_slice %32 {offsets = [48, 0], sizes = [16, 64], strides = [1, 1]} : vector<64x64xf32> to vector<16x64xf32>
    %cst_39 = arith.constant dense<0.000000e+00> : vector<8x64xf32>
    %120 = tpu.matmul %118, %119, %cst_39 {dimension_numbers = #tpu.dot_dimension_numbers<[1], [0], [0], [1], [0, 0, 1, 1], [], []>} : vector<8x16xf32>, vector<16x64xf32>, vector<8x64xf32> -> vector<8x64xf32>
    %121 = arith.addf %99, %120 : vector<8x64xf32>
    %c0_40 = arith.constant 0 : index
    %c0_41 = arith.constant 0 : index
    %122 = vector.load %arg6[%c0_40, %c0_41] : memref<1x64xf32, #tpu.memory_space<vmem>>, vector<1x64xf32>
    %123 = vector.broadcast %122 : vector<1x64xf32> to vector<8x64xf32>
    %124 = arith.addf %121, %123 : vector<8x64xf32>
    %125 = arith.addf %1, %124 : vector<8x64xf32>
    %cst_42 = arith.constant dense<0.000000e+00> : vector<8xf32>
    %126 = vector.multi_reduction <add>, %125, %cst_42 [1] : vector<8x64xf32> to vector<8xf32>
    %127 = vector.shape_cast %126 : vector<8xf32> to vector<8x1xf32>
    %cst_43 = arith.constant 6.400000e+01 : f32
    %128 = vector.broadcast %cst_43 : f32 to vector<8x1xf32>
    %129 = arith.divf %127, %128 : vector<8x1xf32>
    %130 = vector.broadcast %129 : vector<8x1xf32> to vector<8x64xf32>
    %131 = arith.subf %125, %130 : vector<8x64xf32>
    %132 = arith.mulf %131, %131 : vector<8x64xf32>
    %cst_44 = arith.constant dense<0.000000e+00> : vector<8xf32>
    %133 = vector.multi_reduction <add>, %132, %cst_44 [1] : vector<8x64xf32> to vector<8xf32>
    %134 = vector.shape_cast %133 : vector<8xf32> to vector<8x1xf32>
    %cst_45 = arith.constant 6.400000e+01 : f32
    %135 = vector.broadcast %cst_45 : f32 to vector<8x1xf32>
    %136 = arith.divf %134, %135 : vector<8x1xf32>
    %137 = vector.broadcast %129 : vector<8x1xf32> to vector<8x64xf32>
    %138 = arith.subf %125, %137 : vector<8x64xf32>
    %cst_46 = arith.constant 9.99999974E-6 : f32
    %139 = vector.broadcast %cst_46 : f32 to vector<8x1xf32>
    %140 = arith.addf %136, %139 : vector<8x1xf32>
    %141 = math.rsqrt %140 : vector<8x1xf32>
    %142 = vector.broadcast %141 : vector<8x1xf32> to vector<8x64xf32>
    %143 = arith.mulf %138, %142 : vector<8x64xf32>
    %c0_47 = arith.constant 0 : index
    %c0_48 = arith.constant 0 : index
    %144 = vector.load %arg7[%c0_47, %c0_48] : memref<64x256xf32, #tpu.memory_space<vmem>>, vector<64x256xf32>
    %cst_49 = arith.constant dense<0.000000e+00> : vector<8x256xf32>
    %145 = tpu.matmul %143, %144, %cst_49 {dimension_numbers = #tpu.dot_dimension_numbers<[1], [0], [0], [1], [0, 0, 1, 1], [], []>} : vector<8x64xf32>, vector<64x256xf32>, vector<8x256xf32> -> vector<8x256xf32>
    %c0_50 = arith.constant 0 : index
    %c0_51 = arith.constant 0 : index
    %146 = vector.load %arg8[%c0_50, %c0_51] : memref<1x256xf32, #tpu.memory_space<vmem>>, vector<1x256xf32>
    %147 = vector.broadcast %146 : vector<1x256xf32> to vector<8x256xf32>
    %148 = arith.addf %145, %147 : vector<8x256xf32>
    %cst_52 = arith.constant 0.000000e+00 : f32
    %149 = vector.broadcast %cst_52 : f32 to vector<8x256xf32>
    %150 = arith.maximumf %148, %149 : vector<8x256xf32>
    %c0_53 = arith.constant 0 : index
    %c0_54 = arith.constant 0 : index
    %151 = vector.load %arg9[%c0_53, %c0_54] : memref<256x64xf32, #tpu.memory_space<vmem>>, vector<256x64xf32>
    %cst_55 = arith.constant dense<0.000000e+00> : vector<8x64xf32>
    %152 = tpu.matmul %150, %151, %cst_55 {dimension_numbers = #tpu.dot_dimension_numbers<[1], [0], [0], [1], [0, 0, 1, 1], [], []>} : vector<8x256xf32>, vector<256x64xf32>, vector<8x64xf32> -> vector<8x64xf32>
    %c0_56 = arith.constant 0 : index
    %c0_57 = arith.constant 0 : index
    %153 = vector.load %arg10[%c0_56, %c0_57] : memref<1x64xf32, #tpu.memory_space<vmem>>, vector<1x64xf32>
    %154 = vector.broadcast %153 : vector<1x64xf32> to vector<8x64xf32>
    %155 = arith.addf %152, %154 : vector<8x64xf32>
    %156 = arith.addf %125, %155 : vector<8x64xf32>
    %157 = vector.shape_cast %156 : vector<8x64xf32> to vector<1x8x64xf32>
    %c0_58 = arith.constant 0 : index
    %c0_59 = arith.constant 0 : index
    %c0_60 = arith.constant 0 : index
    %158 = vector.load %arg11[%c0_58, %c0_59, %c0_60] : memref<1x8x64xf32, #tpu.memory_space<vmem>>, vector<1x8x64xf32>
    tpu.vector_store %arg11[%c0_58, %c0_59, %c0_60], %157 {strides = array<i32>} : memref<1x8x64xf32, #tpu.memory_space<vmem>>, vector<1x8x64xf32>,
    return
  }
  func.func @transform_0(%arg0: i32) -> (i32, i32, i32) {
    %c0_i32 = arith.constant 0 : i32
    %c0_i32_0 = arith.constant 0 : i32
    %c0_i32_1 = arith.constant 0 : i32
    return %arg0, %c0_i32, %c0_i32_0 : i32, i32, i32
  }
  func.func @transform_1(%arg0: i32) -> (i32, i32) {
    %c0_i32 = arith.constant 0 : i32
    %c0_i32_0 = arith.constant 0 : i32
    %c0_i32_1 = arith.constant 0 : i32
    return %c0_i32, %c0_i32_0 : i32, i32
  }
  func.func @transform_2(%arg0: i32) -> (i32, i32) {
    %c0_i32 = arith.constant 0 : i32
    %c0_i32_0 = arith.constant 0 : i32
    %c0_i32_1 = arith.constant 0 : i32
    return %c0_i32, %c0_i32_0 : i32, i32
  }
  func.func @transform_3(%arg0: i32) -> (i32, i32) {
    %c0_i32 = arith.constant 0 : i32
    %c0_i32_0 = arith.constant 0 : i32
    %c0_i32_1 = arith.constant 0 : i32
    return %c0_i32, %c0_i32_0 : i32, i32
  }
  func.func @transform_4(%arg0: i32) -> (i32, i32) {
    %c0_i32 = arith.constant 0 : i32
    %c0_i32_0 = arith.constant 0 : i32
    %c0_i32_1 = arith.constant 0 : i32
    return %c0_i32, %c0_i32_0 : i32, i32
  }
  func.func @transform_5(%arg0: i32) -> (i32, i32) {
    %c0_i32 = arith.constant 0 : i32
    %c0_i32_0 = arith.constant 0 : i32
    %c0_i32_1 = arith.constant 0 : i32
    return %c0_i32, %c0_i32_0 : i32, i32
  }
  func.func @transform_6(%arg0: i32) -> (i32, i32) {
    %c0_i32 = arith.constant 0 : i32
    %c0_i32_0 = arith.constant 0 : i32
    %c0_i32_1 = arith.constant 0 : i32
    return %c0_i32, %c0_i32_0 : i32, i32
  }
  func.func @transform_7(%arg0: i32) -> (i32, i32) {
    %c0_i32 = arith.constant 0 : i32
    %c0_i32_0 = arith.constant 0 : i32
    %c0_i32_1 = arith.constant 0 : i32
    return %c0_i32, %c0_i32_0 : i32, i32
  }
  func.func @transform_8(%arg0: i32) -> (i32, i32) {
    %c0_i32 = arith.constant 0 : i32
    %c0_i32_0 = arith.constant 0 : i32
    %c0_i32_1 = arith.constant 0 : i32
    return %c0_i32, %c0_i32_0 : i32, i32
  }
  func.func @transform_9(%arg0: i32) -> (i32, i32) {
    %c0_i32 = arith.constant 0 : i32
    %c0_i32_0 = arith.constant 0 : i32
    %c0_i32_1 = arith.constant 0 : i32
    return %c0_i32, %c0_i32_0 : i32, i32
  }
  func.func @transform_10(%arg0: i32) -> (i32, i32, i32) {
    %c0_i32 = arith.constant 0 : i32
    %c0_i32_0 = arith.constant 0 : i32
    %c0_i32_1 = arith.constant 0 : i32
    return %arg0, %c0_i32, %c0_i32_0 : i32, i32, i32
  }
}

</mosaic_0001>

<llo_original>
// kernel: tpu_custom_call.1
$region0: #{tpu_custom_call.1}
  #allocation0 [shape = 'u32[]', space=smem, size = 0x4, offset = 0x4, fixed_abs, tag = 'smem constant byte address 0x4 - core index']
  #allocation1 [shape = 'u32[144,128]{1,0:T(1,128)}', space=vmem, size = 0x12000, scoped, tag = 'internal scratch']
  %s0 = inlined_call_operand.vmem [shape: f32[2,8,64], index: 0, kind: input, shape index: {}]
  %s1 = inlined_call_operand.vmem [shape: f32[8,8], index: 1, kind: input, shape index: {}]
  %s2 = inlined_call_operand.vmem [shape: f32[64,192], index: 2, kind: input, shape index: {}]
  %s3 = inlined_call_operand.vmem [shape: f32[1,192], index: 3, kind: input, shape index: {}]
  %s4 = inlined_call_operand.vmem [shape: f32[64,64], index: 4, kind: input, shape index: {}]
  %s5 = inlined_call_operand.vmem [shape: f32[1,64], index: 5, kind: input, shape index: {}]
  %s6 = inlined_call_operand.vmem [shape: f32[64,256], index: 6, kind: input, shape index: {}]
  %s7 = inlined_call_operand.vmem [shape: f32[1,256], index: 7, kind: input, shape index: {}]
  %s8 = inlined_call_operand.vmem [shape: f32[256,64], index: 8, kind: input, shape index: {}]
  %s9 = inlined_call_operand.vmem [shape: f32[1,64], index: 9, kind: input, shape index: {}]
  %s10 = inlined_call_operand.hbm [shape: f32[2,8,64], index: 10, kind: output, shape index: {}]
  %s11 = sld [smem:[#allocation0]]
  $region73: #{tpu_custom_call.1} parent=0
    _
  %s13 = ssub.s32 1, %s11
  %s14 = scalar_select 0, %s13, %s11
  $region1: #{tpu_custom_call.1} parent=0
    #allocation2 [shape = 'u8[8192]{0}', space=vmem, size = 0x2000, scoped, tag = 'output window, operand 0']
    #allocation3 [shape = 's32[2]{0}', space=sflag, size = 0x8, scoped, tag = 'scoped memory for tpu_custom_call.1']
    %15 = vsyncpa [#allocation3], 0
    %s16 = scalar_lea.sflag [#allocation3], 1
    %17 = vsyncpa %s16, 0
    loop: start=0, step=1, limit=4
    $region2: #{tpu_custom_call.1} parent=1 // loop_pre_header
      _
    $region3: #{tpu_custom_call.1} parent=1 // loop_header
      %s19 = sphi 0, %s23
      %p20 = scmp.ge.s32.totalorder %s19, 4
      %s29 = sphi 0, %s31
      %s32 = sphi 0, %s29
      %s33 = sphi 0, %s32
      %s49 = sphi 0, %s33
      %s53 = sphi 0, %s53
      %s55 = sphi 0, %s53
      %s56 = sphi 0, %s55
      %s70 = sphi 0, %s56
      %s74 = sphi 0, %s74
      %s76 = sphi 0, %s74
      %s77 = sphi 0, %s76
      %s91 = sphi 0, %s77
      %s95 = sphi 0, %s95
      %s97 = sphi 0, %s95
      %s98 = sphi 0, %s97
      %s112 = sphi 0, %s98
      %s116 = sphi 0, %s116
      %s118 = sphi 0, %s116
      %s119 = sphi 0, %s118
      %s133 = sphi 0, %s119
      %s137 = sphi 0, %s137
      %s139 = sphi 0, %s137
      %s140 = sphi 0, %s139
      %s154 = sphi 0, %s140
      %s158 = sphi 0, %s158
      %s160 = sphi 0, %s158
      %s161 = sphi 0, %s160
      %s175 = sphi 0, %s161
      %s179 = sphi 0, %s179
      %s181 = sphi 0, %s179
      %s182 = sphi 0, %s181
      %s196 = sphi 0, %s182
      %s200 = sphi 0, %s200
      %s202 = sphi 0, %s200
      %s203 = sphi 0, %s202
      %s217 = sphi 0, %s203
      %s221 = sphi 0, %s221
      %s223 = sphi 0, %s221
      %s224 = sphi 0, %s223
      %s238 = sphi 0, %s224
      %s244 = sphi 0, %s246
      %s247 = sphi 0, %s244
      %s248 = sphi 0, %s247
      %s264 = sphi 0, %s248
    $region4: #{tpu_custom_call.1} parent=1 // loop_header_branch
      %22 = sbr.rel (%p20) target = $region8
    $region5: #{tpu_custom_call.1} parent=1 // loop_body
      %s24 = ssub.s32 %s19, 1
      %s25 = ssub.s32 %s19, 2
      %s26 = sadd.s32 %s19, 1
      %s27 = ssub.s32 %s19, %s26
      %p28 = scmp.eq.s32.totalorder %s27, 0
      %s30 = sadd.s32 %s29, 1
      %s31 = scalar_select %p28, %s29, %s30
      %p34 = pneg %p28
      %p35 = scmp.eq.s32.totalorder %s19, 1
      %p36 = por %p34, %p35
      %p37 = scmp.ne.s32.totalorder %s29, %s32
      %p38 = scmp.eq.s32.totalorder %s19, 0
      %p39 = por %p37, %p38
      %p40 = scmp.ne.s32.totalorder %s29, %s32
      %p41 = scmp.eq.s32.totalorder %s24, 1
      %p42 = por %p40, %p41
      %p43 = scmp.ne.s32.totalorder %s32, %s33
      %p44 = scmp.eq.s32.totalorder %s24, 0
      %p45 = por %p43, %p44
      %p46 = scmp.ne.s32.totalorder %s32, %s33
      %p47 = scmp.eq.s32.totalorder %s25, 1
      %p48 = por %p46, %p47
      %p50 = scmp.ne.s32.totalorder %s33, %s49
      %p51 = scmp.eq.s32.totalorder %s25, 0
      %p52 = por %p50, %p51
      %s54 = sadd.s32 %s53, 1
      %p57 = scmp.eq.s32.totalorder %s19, 1
      %p58 = scmp.ne.s32.totalorder %s53, %s55
      %p59 = scmp.eq.s32.totalorder %s19, 0
      %p60 = por %p58, %p59
      %p61 = scmp.ne.s32.totalorder %s53, %s55
      %p62 = scmp.eq.s32.totalorder %s24, 1
      %p63 = por %p61, %p62
      %p64 = scmp.ne.s32.totalorder %s55, %s56
      %p65 = scmp.eq.s32.totalorder %s24, 0
      %p66 = por %p64, %p65
      %p67 = scmp.ne.s32.totalorder %s55, %s56
      %p68 = scmp.eq.s32.totalorder %s25, 1
      %p69 = por %p67, %p68
      %p71 = scmp.ne.s32.totalorder %s56, %s70
      %p72 = scmp.eq.s32.totalorder %s25, 0
      %p73 = por %p71, %p72
      %s75 = sadd.s32 %s74, 1
      %p78 = scmp.eq.s32.totalorder %s19, 1
      %p79 = scmp.ne.s32.totalorder %s74, %s76
      %p80 = scmp.eq.s32.totalorder %s19, 0
      %p81 = por %p79, %p80
      %p82 = scmp.ne.s32.totalorder %s74, %s76
      %p83 = scmp.eq.s32.totalorder %s24, 1
      %p84 = por %p82, %p83
      %p85 = scmp.ne.s32.totalorder %s76, %s77
      %p86 = scmp.eq.s32.totalorder %s24, 0
      %p87 = por %p85, %p86
      %p88 = scmp.ne.s32.totalorder %s76, %s77
      %p89 = scmp.eq.s32.totalorder %s25, 1
      %p90 = por %p88, %p89
      %p92 = scmp.ne.s32.totalorder %s77, %s91
      %p93 = scmp.eq.s32.totalorder %s25, 0
      %p94 = por %p92, %p93
      %s96 = sadd.s32 %s95, 1
      %p99 = scmp.eq.s32.totalorder %s19, 1
      %p100 = scmp.ne.s32.totalorder %s95, %s97
      %p101 = scmp.eq.s32.totalorder %s19, 0
      %p102 = por %p100, %p101
      %p103 = scmp.ne.s32.totalorder %s95, %s97
      %p104 = scmp.eq.s32.totalorder %s24, 1
      %p105 = por %p103, %p104
      %p106 = scmp.ne.s32.totalorder %s97, %s98
      %p107 = scmp.eq.s32.totalorder %s24, 0
      %p108 = por %p106, %p107
      %p109 = scmp.ne.s32.totalorder %s97, %s98
      %p110 = scmp.eq.s32.totalorder %s25, 1
      %p111 = por %p109, %p110
      %p113 = scmp.ne.s32.totalorder %s98, %s112
      %p114 = scmp.eq.s32.totalorder %s25, 0
      %p115 = por %p113, %p114
      %s117 = sadd.s32 %s116, 1
      %p120 = scmp.eq.s32.totalorder %s19, 1
      %p121 = scmp.ne.s32.totalorder %s116, %s118
      %p122 = scmp.eq.s32.totalorder %s19, 0
      %p123 = por %p121, %p122
      %p124 = scmp.ne.s32.totalorder %s116, %s118
      %p125 = scmp.eq.s32.totalorder %s24, 1
      %p126 = por %p124, %p125
      %p127 = scmp.ne.s32.totalorder %s118, %s119
      %p128 = scmp.eq.s32.totalorder %s24, 0
      %p129 = por %p127, %p128
      %p130 = scmp.ne.s32.totalorder %s118, %s119
      %p131 = scmp.eq.s32.totalorder %s25, 1
      %p132 = por %p130, %p131
      %p134 = scmp.ne.s32.totalorder %s119, %s133
      %p135 = scmp.eq.s32.totalorder %s25, 0
      %p136 = por %p134, %p135
      %s138 = sadd.s32 %s137, 1
      %p141 = scmp.eq.s32.totalorder %s19, 1
      %p142 = scmp.ne.s32.totalorder %s137, %s139
      %p143 = scmp.eq.s32.totalorder %s19, 0
      %p144 = por %p142, %p143
      %p145 = scmp.ne.s32.totalorder %s137, %s139
      %p146 = scmp.eq.s32.totalorder %s24, 1
      %p147 = por %p145, %p146
      %p148 = scmp.ne.s32.totalorder %s139, %s140
      %p149 = scmp.eq.s32.totalorder %s24, 0
      %p150 = por %p148, %p149
      %p151 = scmp.ne.s32.totalorder %s139, %s140
      %p152 = scmp.eq.s32.totalorder %s25, 1
      %p153 = por %p151, %p152
      %p155 = scmp.ne.s32.totalorder %s140, %s154
      %p156 = scmp.eq.s32.totalorder %s25, 0
      %p157 = por %p155, %p156
      %s159 = sadd.s32 %s158, 1
      %p162 = scmp.eq.s32.totalorder %s19, 1
      %p163 = scmp.ne.s32.totalorder %s158, %s160
      %p164 = scmp.eq.s32.totalorder %s19, 0
      %p165 = por %p163, %p164
      %p166 = scmp.ne.s32.totalorder %s158, %s160
      %p167 = scmp.eq.s32.totalorder %s24, 1
      %p168 = por %p166, %p167
      %p169 = scmp.ne.s32.totalorder %s160, %s161
      %p170 = scmp.eq.s32.totalorder %s24, 0
      %p171 = por %p169, %p170
      %p172 = scmp.ne.s32.totalorder %s160, %s161
      %p173 = scmp.eq.s32.totalorder %s25, 1
      %p174 = por %p172, %p173
      %p176 = scmp.ne.s32.totalorder %s161, %s175
      %p177 = scmp.eq.s32.totalorder %s25, 0
      %p178 = por %p176, %p177
      %s180 = sadd.s32 %s179, 1
      %p183 = scmp.eq.s32.totalorder %s19, 1
      %p184 = scmp.ne.s32.totalorder %s179, %s181
      %p185 = scmp.eq.s32.totalorder %s19, 0
      %p186 = por %p184, %p185
      %p187 = scmp.ne.s32.totalorder %s179, %s181
      %p188 = scmp.eq.s32.totalorder %s24, 1
      %p189 = por %p187, %p188
      %p190 = scmp.ne.s32.totalorder %s181, %s182
      %p191 = scmp.eq.s32.totalorder %s24, 0
      %p192 = por %p190, %p191
      %p193 = scmp.ne.s32.totalorder %s181, %s182
      %p194 = scmp.eq.s32.totalorder %s25, 1
      %p195 = por %p193, %p194
      %p197 = scmp.ne.s32.totalorder %s182, %s196
      %p198 = scmp.eq.s32.totalorder %s25, 0
      %p199 = por %p197, %p198
      %s201 = sadd.s32 %s200, 1
      %p204 = scmp.eq.s32.totalorder %s19, 1
      %p205 = scmp.ne.s32.totalorder %s200, %s202
      %p206 = scmp.eq.s32.totalorder %s19, 0
      %p207 = por %p205, %p206
      %p208 = scmp.ne.s32.totalorder %s200, %s202
      %p209 = scmp.eq.s32.totalorder %s24, 1
      %p210 = por %p208, %p209
      %p211 = scmp.ne.s32.totalorder %s202, %s203
      %p212 = scmp.eq.s32.totalorder %s24, 0
      %p213 = por %p211, %p212
      %p214 = scmp.ne.s32.totalorder %s202, %s203
      %p215 = scmp.eq.s32.totalorder %s25, 1
      %p216 = por %p214, %p215
      %p218 = scmp.ne.s32.totalorder %s203, %s217
      %p219 = scmp.eq.s32.totalorder %s25, 0
      %p220 = por %p218, %p219
      %s222 = sadd.s32 %s221, 1
      %p225 = scmp.eq.s32.totalorder %s19, 1
      %p226 = scmp.ne.s32.totalorder %s221, %s223
      %p227 = scmp.eq.s32.totalorder %s19, 0
      %p228 = por %p226, %p227
      %p229 = scmp.ne.s32.totalorder %s221, %s223
      %p230 = scmp.eq.s32.totalorder %s24, 1
      %p231 = por %p229, %p230
      %p232 = scmp.ne.s32.totalorder %s223, %s224
      %p233 = scmp.eq.s32.totalorder %s24, 0
      %p234 = por %p232, %p233
      %p235 = scmp.ne.s32.totalorder %s223, %s224
      %p236 = scmp.eq.s32.totalorder %s25, 1
      %p237 = por %p235, %p236
      %p239 = scmp.ne.s32.totalorder %s224, %s238
      %p240 = scmp.eq.s32.totalorder %s25, 0
      %p241 = por %p239, %p240
      %s242 = ssub.s32 %s19, %s26
      %p243 = scmp.eq.s32.totalorder %s242, 0
      %s245 = sadd.s32 %s244, 1
      %s246 = scalar_select %p243, %s244, %s245
      %p249 = pneg %p243
      %p250 = scmp.eq.s32.totalorder %s19, 1
      %p251 = por %p249, %p250
      %p252 = scmp.ne.s32.totalorder %s244, %s247
      %p253 = scmp.eq.s32.totalorder %s19, 0
      %p254 = por %p252, %p253
      %p255 = scmp.ne.s32.totalorder %s244, %s247
      %p256 = scmp.eq.s32.totalorder %s24, 1
      %p257 = por %p255, %p256
      %p258 = scmp.ne.s32.totalorder %s247, %s248
      %p259 = scmp.eq.s32.totalorder %s24, 0
      %p260 = por %p258, %p259
      %p261 = scmp.ne.s32.totalorder %s247, %s248
      %p262 = scmp.eq.s32.totalorder %s25, 1
      %p263 = por %p261, %p262
      %p265 = scmp.ne.s32.totalorder %s248, %s264
      %p266 = scmp.eq.s32.totalorder %s25, 0
      %p267 = por %p265, %p266
      %p268 = scmp.le.s32.totalorder 1, %s19
      %p269 = scmp.lt.s32.totalorder %s19, 3
      %p270 = pnand %p268, %p269
      %p271 = pneg %p270
      // Predicated region
      $region9: #{tpu_custom_call.1} parent=5 // pred_check
        _
      $region10: #{tpu_custom_call.1} parent=5 // pred_check_branch
        %273 = sbr.rel (%p270) target = $region12
      $region11: #{tpu_custom_call.1} parent=5 // pred_region
        %s274 = ssub.s32 %s19, 1
        // Predicated region
        $region13: #{tpu_custom_call.1} parent=11 // pred_check
          %p275 = pneg %p66
        $region14: #{tpu_custom_call.1} parent=11 // pred_check_branch
          %277 = sbr.rel (%p275) target = $region16
        $region15: #{tpu_custom_call.1} parent=11 // pred_region
          _
        $region16: #{tpu_custom_call.1} parent=11 // pred_fallthru
          _
        // Predicated region
        $region17: #{tpu_custom_call.1} parent=11 // pred_check
          %p278 = pneg %p87
        $region18: #{tpu_custom_call.1} parent=11 // pred_check_branch
          %280 = sbr.rel (%p278) target = $region20
        $region19: #{tpu_custom_call.1} parent=11 // pred_region
          _
        $region20: #{tpu_custom_call.1} parent=11 // pred_fallthru
          _
        // Predicated region
        $region21: #{tpu_custom_call.1} parent=11 // pred_check
          %p281 = pneg %p108
        $region22: #{tpu_custom_call.1} parent=11 // pred_check_branch
          %283 = sbr.rel (%p281) target = $region24
        $region23: #{tpu_custom_call.1} parent=11 // pred_region
          _
        $region24: #{tpu_custom_call.1} parent=11 // pred_fallthru
          _
        // Predicated region
        $region25: #{tpu_custom_call.1} parent=11 // pred_check
          %p284 = pneg %p129
        $region26: #{tpu_custom_call.1} parent=11 // pred_check_branch
          %286 = sbr.rel (%p284) target = $region28
        $region27: #{tpu_custom_call.1} parent=11 // pred_region
          _
        $region28: #{tpu_custom_call.1} parent=11 // pred_fallthru
          _
        // Predicated region
        $region29: #{tpu_custom_call.1} parent=11 // pred_check
          %p287 = pneg %p150
        $region30: #{tpu_custom_call.1} parent=11 // pred_check_branch
          %289 = sbr.rel (%p287) target = $region32
        $region31: #{tpu_custom_call.1} parent=11 // pred_region
          _
        $region32: #{tpu_custom_call.1} parent=11 // pred_fallthru
          _
        // Predicated region
        $region33: #{tpu_custom_call.1} parent=11 // pred_check
          %p290 = pneg %p171
        $region34: #{tpu_custom_call.1} parent=11 // pred_check_branch
          %292 = sbr.rel (%p290) target = $region36
        $region35: #{tpu_custom_call.1} parent=11 // pred_region
          _
        $region36: #{tpu_custom_call.1} parent=11 // pred_fallthru
          _
        // Predicated region
        $region37: #{tpu_custom_call.1} parent=11 // pred_check
          %p293 = pneg %p192
        $region38: #{tpu_custom_call.1} parent=11 // pred_check_branch
          %295 = sbr.rel (%p293) target = $region40
        $region39: #{tpu_custom_call.1} parent=11 // pred_region
          _
        $region40: #{tpu_custom_call.1} parent=11 // pred_fallthru
          _
        // Predicated region
        $region41: #{tpu_custom_call.1} parent=11 // pred_check
          %p296 = pneg %p213
        $region42: #{tpu_custom_call.1} parent=11 // pred_check_branch
          %298 = sbr.rel (%p296) target = $region44
        $region43: #{tpu_custom_call.1} parent=11 // pred_region
          _
        $region44: #{tpu_custom_call.1} parent=11 // pred_fallthru
          _
        // Predicated region
        $region45: #{tpu_custom_call.1} parent=11 // pred_check
          %p299 = pneg %p234
        $region46: #{tpu_custom_call.1} parent=11 // pred_check_branch
          %301 = sbr.rel (%p299) target = $region48
        $region47: #{tpu_custom_call.1} parent=11 // pred_region
          _
        $region48: #{tpu_custom_call.1} parent=11 // pred_fallthru
          _
      $region12: #{tpu_custom_call.1} parent=5 // pred_fallthru
        _
      %p302 = scmp.lt.s32.totalorder %s19, 2
      // Predicated region
      $region49: #{tpu_custom_call.1} parent=5 // pred_check
        %p303 = pneg %p302
      $region50: #{tpu_custom_call.1} parent=5 // pred_check_branch
        %305 = sbr.rel (%p303) target = $region52
      $region51: #{tpu_custom_call.1} parent=5 // pred_region
        // Predicated region
        $region53: #{tpu_custom_call.1} parent=51 // pred_check
          %p306 = pneg %p39
        $region54: #{tpu_custom_call.1} parent=51 // pred_check_branch
          %308 = sbr.rel (%p306) target = $region56
        $region55: #{tpu_custom_call.1} parent=51 // pred_region
          %p309 = scmp.lt.s32.totalorder %s19, 1
          %s310 = scalar_select %p309, %s19, 1
          %s311 = smul.addr %s310, 8
          %s312 = scalar_lea.vmem %s0, %s311
        $region56: #{tpu_custom_call.1} parent=51 // pred_fallthru
          _
      $region52: #{tpu_custom_call.1} parent=5 // pred_fallthru
        _
      %p313 = scmp.le.s32.totalorder 1, %s19
      %p314 = scmp.lt.s32.totalorder %s19, 3
      %p315 = pnand %p313, %p314
      %p316 = pneg %p315
      // Predicated region
      $region57: #{tpu_custom_call.1} parent=5 // pred_check
        _
      $region58: #{tpu_custom_call.1} parent=5 // pred_check_branch
        %318 = sbr.rel (%p315) target = $region60
      $region59: #{tpu_custom_call.1} parent=5 // pred_region
        %s319 = ssub.s32 %s19, 1
        %p320 = scmp.lt.s32.totalorder %s24, 1
        %s321 = scalar_select %p320, %s24, 1
        %s322 = smul.addr %s321, 8
        %s323 = scalar_lea.vmem %s0, %s322
        %p324 = pneg %p45
        %p325 = pneg %p42
        %p326 = pneg %p66
        %p327 = pneg %p63
        %p328 = pneg %p87
        %p329 = pneg %p84
        %p330 = pneg %p108
        %p331 = pneg %p105
        %p332 = pneg %p129
        %p333 = pneg %p126
        %p334 = pneg %p150
        %p335 = pneg %p147
        %p336 = pneg %p171
        %p337 = pneg %p168
        %p338 = pneg %p192
        %p339 = pneg %p189
        %p340 = pneg %p213
        %p341 = pneg %p210
        %p342 = pneg %p234
        %p343 = pneg %p231
        %p344 = pneg %p260
        %p345 = pneg %p257
        %s346 = sand.u32 %s247, 1
        %s347 = scalar_lea.sflag [#allocation3], %s346
        %s348 = sand.u32 %s247, 1
        %s349 = smul.addr %s348, 8
        %s350 = scalar_lea.vmem [#allocation2], %s349
        %p351 = scmp.lt.s32.totalorder %s24, 1
        %s352 = scalar_select %p351, %s24, 1
        %s353 = smul.addr %s352, 8
        %s354 = scalar_lea.vmem %s0, %s353
        %v355 = vld [vmem:[%s354] sm:$0xff]
        %vm356 = vcmask 523264
        %v357 = vsel %vm356, %v355, 0.0
        %358 = vadd.xlane.f32.xlu0 %v357
        %v359 = vpop.xlane.xlu0 %358
        %v360 = vrcp.pop 64.0
        %v361 = vmul.f32 %v359, %v360
        %v362 = vsub.f32 %v355, %v361
        %v363 = vmul.f32 %v362, %v362
        %v364 = vsel %vm356, %v363, 0.0
        %365 = vadd.xlane.f32.xlu0 %v364
        %v366 = vpop.xlane.xlu0 %365
        %v367 = vmul.f32 %v366, %v360
        %v368 = vadd.f32 %v367, 1e-05
        %v369 = vrsqrt.pop %v368
        %v370 = vmul.f32 %v362, %v369
        %v371 = vld [vmem:[%s2] sm:$0xff]
        %v372 = vld [vmem:[%s2 + $0x8] sm:$0xff]
        %v373 = vld [vmem:[%s2 + $0x10] sm:$0xff]
        %v374 = vld [vmem:[%s2 + $0x18] sm:$0xff]
        %v375 = vld [vmem:[%s2 + $0x20] sm:$0xff]
        %v376 = vld [vmem:[%s2 + $0x28] sm:$0xff]
        %v377 = vld [vmem:[%s2 + $0x30] sm:$0xff]
        %v378 = vld [vmem:[%s2 + $0x38] sm:$0xff]
        %v379 = vld [vmem:[%s2 + $0x40] sm:$0xff]
        %v380 = vld [vmem:[%s2 + $0x48] sm:$0xff]
        %v381 = vld [vmem:[%s2 + $0x50] sm:$0xff]
        %v382 = vld [vmem:[%s2 + $0x58] sm:$0xff]
        %v383 = vld [vmem:[%s2 + $0x60] sm:$0xff]
        %v384 = vld [vmem:[%s2 + $0x68] sm:$0xff]
        %v385 = vld [vmem:[%s2 + $0x70] sm:$0xff]
        %v386 = vld [vmem:[%s2 + $0x78] sm:$0xff]
        %v387 = vld [vmem:[%s3] sm:$0x3]
        %v389 = vlaneseq
        %v390 = vshrl.u32 %v389, 7
        %v391 = vsub.s32 0, %v390
        %v392 = vrot.slane %v387, %v391
        %v393 = vlaneseq
        %v394 = vshrl.u32 %v393, 7
        %v395 = vsub.s32 1, %v394
        %v396 = vrot.slane %v387, %v395
        %v400 = vsel %vm356, %v370, 0
        %402 = vmatprep.subr.mxu0 %v372
        %403 = vmatpush1.msra.mxu0 %v371
        %404 = vmatprep.subr.mxu0 %v374
        %405 = vmatpush1.msra.mxu0 %v373
        %406 = vmatprep.subr.mxu0 %v376
        %407 = vmatpush1.msra.mxu0 %v375
        %408 = vmatprep.subr.mxu0 %v378
        %409 = vmatpush1.msra.mxu0 %v377
        %410 = vmatprep.subr.mxu0 %v380
        %411 = vmatpush1.msra.mxu0 %v379
        %412 = vmatprep.subr.mxu0 %v382
        %413 = vmatpush1.msra.mxu0 %v381
        %414 = vmatprep.subr.mxu0 %v384
        %415 = vmatpush1.msra.mxu0 %v383
        %416 = vmatprep.subr.mxu0 %v386
        %417 = vmatpush1.msra.mxu0 %v385
        %418 = vmatprep.subr.mxu0 0.0
        %419 = vmatpush1.msra.mxu0 0.0
        %420 = vmatprep.subr.mxu0 0.0
        %421 = vmatpush1.msra.mxu0 0.0
        %422 = vmatprep.subr.mxu0 0.0
        %423 = vmatpush1.msra.mxu0 0.0
        %424 = vmatprep.subr.mxu0 0.0
        %425 = vmatpush1.msra.mxu0 0.0
        %426 = vmatprep.subr.mxu0 0.0
        %427 = vmatpush1.msra.mxu0 0.0
        %428 = vmatprep.subr.mxu0 0.0
        %429 = vmatpush1.msra.mxu0 0.0
        %430 = vmatprep.subr.mxu0 0.0
        %431 = vmatpush1.msra.mxu0 0.0
        %432 = vmatprep.subr.mxu0 0.0
        %433 = vmatpush1.msra.mxu0 0.0
        %434 = vmatprep.subr.mxu0 0.0
        %435 = vmatpush1.msra.mxu0 0.0
        %436 = vmatprep.subr.mxu0 0.0
        %437 = vmatpush1.msra.mxu0 0.0
        %438 = vmatprep.subr.mxu0 0.0
        %439 = vmatpush1.msra.mxu0 0.0
        %440 = vmatprep.subr.mxu0 0.0
        %441 = vmatpush1.msra.mxu0 0.0
        %442 = vmatprep.subr.mxu0 0.0
        %443 = vmatpush1.msra.mxu0 0.0
        %444 = vmatprep.subr.mxu0 0.0
        %445 = vmatpush1.msra.mxu0 0.0
        %446 = vmatprep.subr.mxu0 0.0
        %447 = vmatpush1.msra.mxu0 0.0
        %448 = vmatprep.subr.mxu0 0.0
        %449 = vmatpush1.msra.mxu0 0.0
        %450 = vmatprep.subr.mxu0 0.0
        %451 = vmatpush1.msra.mxu0 0.0
        %452 = vmatprep.subr.mxu0 0.0
        %453 = vmatpush1.msra.mxu0 0.0
        %454 = vmatprep.subr.mxu0 0.0
        %455 = vmatpush1.msra.mxu0 0.0
        %456 = vmatprep.subr.mxu0 0.0
        %457 = vmatpush1.msra.mxu0 0.0
        %458 = vmatprep.subr.mxu0 0.0
        %459 = vmatpush1.msra.mxu0 0.0
        %460 = vmatprep.subr.mxu0 0.0
        %461 = vmatpush1.msra.mxu0 0.0
        %462 = vmatprep.subr.mxu0 0.0
        %463 = vmatpush1.msra.mxu0 0.0
        %464 = vmatprep.subr.mxu0 0.0
        %465 = vmatpush1.msra.mxu0 0.0
        %466 = vmatprep.mubr.f32.mxu0 0.0
        %467 = vmatmul.mubr.f32.gmra.mrb[0].mxu0 %v400
        %v468 = vpop.f32.mrb[0].mxu0
        %v469 = vadd.f32 %v392, %v468
        %v470 = vpop.f32.mrb[0].mxu0
        %v471 = vadd.f32 %v396, %v470
        %472 = vdwg.mxu0
        %v473 = vld [vmem:[%s1] sm:$0xff]
        %v474 = vld [vmem:[%s4] sm:$0xff]
        %v475 = vld [vmem:[%s4 + $0x8] sm:$0xff]
        %v476 = vld [vmem:[%s4 + $0x10] sm:$0xff]
        %v477 = vld [vmem:[%s4 + $0x18] sm:$0xff]
        %v478 = vld [vmem:[%s4 + $0x20] sm:$0xff]
        %v479 = vld [vmem:[%s4 + $0x28] sm:$0xff]
        %v480 = vld [vmem:[%s4 + $0x30] sm:$0xff]
        %v481 = vld [vmem:[%s4 + $0x38] sm:$0xff]
        %483 = vrot.lane.b32.xlu0 %v469, 64
        %v484 = vpop.permute.xlu0 %483
        %vm485 = vcmask 130048
        %v486 = vsel %vm485, %v469, 0
        %v488 = vsel %vm485, %v484, 0
        %490 = vmatprep.subr.mxu0 0.0
        %491 = vmatpush1.xpose.msra.mxu0 %v488
        %492 = vmatprep.subr.mxu0 0.0
        %493 = vmatpush1.xpose.msra.mxu0 0.0
        %494 = vmatprep.subr.mxu0 0.0
        %495 = vmatpush1.xpose.msra.mxu0 0.0
        %496 = vmatprep.subr.mxu0 0.0
        %497 = vmatpush1.xpose.msra.mxu0 0.0
        %498 = vmatprep.subr.mxu0 0.0
        %499 = vmatpush1.xpose.msra.mxu0 0.0
        %500 = vmatprep.subr.mxu0 0.0
        %501 = vmatpush1.xpose.msra.mxu0 0.0
        %502 = vmatprep.subr.mxu0 0.0
        %503 = vmatpush1.xpose.msra.mxu0 0.0
        %504 = vmatprep.subr.mxu0 0.0
        %505 = vmatpush1.xpose.msra.mxu0 0.0
        %506 = vmatprep.subr.mxu0 0.0
        %507 = vmatpush1.xpose.msra.mxu0 0.0
        %508 = vmatprep.subr.mxu0 0.0
        %509 = vmatpush1.xpose.msra.mxu0 0.0
        %510 = vmatprep.subr.mxu0 0.0
        %511 = vmatpush1.xpose.msra.mxu0 0.0
        %512 = vmatprep.subr.mxu0 0.0
        %513 = vmatpush1.xpose.msra.mxu0 0.0
        %514 = vmatprep.subr.mxu0 0.0
        %515 = vmatpush1.xpose.msra.mxu0 0.0
        %516 = vmatprep.subr.mxu0 0.0
        %517 = vmatpush1.xpose.msra.mxu0 0.0
        %518 = vmatprep.subr.mxu0 0.0
        %519 = vmatpush1.xpose.msra.mxu0 0.0
        %520 = vmatprep.subr.mxu0 0.0
        %521 = vmatpush1.xpose.msra.mxu0 0.0
        %522 = vmatprep.subr.mxu0 0.0
        %523 = vmatpush1.xpose.msra.mxu0 0.0
        %524 = vmatprep.subr.mxu0 0.0
        %525 = vmatpush1.xpose.msra.mxu0 0.0
        %526 = vmatprep.subr.mxu0 0.0
        %527 = vmatpush1.xpose.msra.mxu0 0.0
        %528 = vmatprep.subr.mxu0 0.0
        %529 = vmatpush1.xpose.msra.mxu0 0.0
        %530 = vmatprep.subr.mxu0 0.0
        %531 = vmatpush1.xpose.msra.mxu0 0.0
        %532 = vmatprep.subr.mxu0 0.0
        %533 = vmatpush1.xpose.msra.mxu0 0.0
        %534 = vmatprep.subr.mxu0 0.0
        %535 = vmatpush1.xpose.msra.mxu0 0.0
        %536 = vmatprep.subr.mxu0 0.0
        %537 = vmatpush1.xpose.msra.mxu0 0.0
        %538 = vmatprep.subr.mxu0 0.0
        %539 = vmatpush1.xpose.msra.mxu0 0.0
        %540 = vmatprep.subr.mxu0 0.0
        %541 = vmatpush1.xpose.msra.mxu0 0.0
        %542 = vmatprep.subr.mxu0 0.0
        %543 = vmatpush1.xpose.msra.mxu0 0.0
        %544 = vmatprep.subr.mxu0 0.0
        %545 = vmatpush1.xpose.msra.mxu0 0.0
        %546 = vmatprep.subr.mxu0 0.0
        %547 = vmatpush1.xpose.msra.mxu0 0.0
        %548 = vmatprep.subr.mxu0 0.0
        %549 = vmatpush1.xpose.msra.mxu0 0.0
        %550 = vmatprep.subr.mxu0 0.0
        %551 = vmatpush1.xpose.msra.mxu0 0.0
        %552 = vmatprep.subr.mxu0 0.0
        %553 = vmatpush1.xpose.msra.mxu0 0.0
        %554 = vmatprep.mubr.f32.mxu0 0.0
        %555 = vmatmul.mubr.f32.gmra.mrb[0].mxu0 %v486
        %v556 = vpop.f32.mrb[0].mxu0
        %v557 = vadd.f32 0.0, %v556
        %v558 = vpop.f32.mrb[0].mxu0
        %559 = vdwg.mxu0
        %v560 = vmul.f32 %v557, 0.125
        %v561 = vadd.f32 %v560, %v473
        %vm562 = vcmask 64512
        %v563 = vsel %vm562, %v561, -inf
        %564 = vmax.xlane.f32.xlu0 %v563
        %v565 = vpop.xlane.xlu0 %564
        %v566 = vsub.f32 %v561, %v565
        %v567 = vmul.f32 %v566, 1.442695
        %v568 = vpow.pop %v567
        %v569 = vsel %vm562, %v568, 0.0
        %570 = vadd.xlane.f32.xlu0 %v569
        %v571 = vpop.xlane.xlu0 %570
        %v572 = vrcp.pop %v571
        %v573 = vmul.f32 %v568, %v572
        %v575 = vsel %vm562, %v573, 0
        %577 = vmatprep.subr.mxu0 0.0
        %578 = vmatpush1.msra.mxu0 %v471
        %579 = vmatprep.subr.mxu0 0.0
        %580 = vmatpush1.msra.mxu0 0.0
        %581 = vmatprep.subr.mxu0 0.0
        %582 = vmatpush1.msra.mxu0 0.0
        %583 = vmatprep.subr.mxu0 0.0
        %584 = vmatpush1.msra.mxu0 0.0
        %585 = vmatprep.subr.mxu0 0.0
        %586 = vmatpush1.msra.mxu0 0.0
        %587 = vmatprep.subr.mxu0 0.0
        %588 = vmatpush1.msra.mxu0 0.0
        %589 = vmatprep.subr.mxu0 0.0
        %590 = vmatpush1.msra.mxu0 0.0
        %591 = vmatprep.subr.mxu0 0.0
        %592 = vmatpush1.msra.mxu0 0.0
        %593 = vmatprep.subr.mxu0 0.0
        %594 = vmatpush1.msra.mxu0 0.0
        %595 = vmatprep.subr.mxu0 0.0
        %596 = vmatpush1.msra.mxu0 0.0
        %597 = vmatprep.subr.mxu0 0.0
        %598 = vmatpush1.msra.mxu0 0.0
        %599 = vmatprep.subr.mxu0 0.0
        %600 = vmatpush1.msra.mxu0 0.0
        %601 = vmatprep.subr.mxu0 0.0
        %602 = vmatpush1.msra.mxu0 0.0
        %603 = vmatprep.subr.mxu0 0.0
        %604 = vmatpush1.msra.mxu0 0.0
        %605 = vmatprep.subr.mxu0 0.0
        %606 = vmatpush1.msra.mxu0 0.0
        %607 = vmatprep.subr.mxu0 0.0
        %608 = vmatpush1.msra.mxu0 0.0
        %609 = vmatprep.subr.mxu0 0.0
        %610 = vmatpush1.msra.mxu0 0.0
        %611 = vmatprep.subr.mxu0 0.0
        %612 = vmatpush1.msra.mxu0 0.0
        %613 = vmatprep.subr.mxu0 0.0
        %614 = vmatpush1.msra.mxu0 0.0
        %615 = vmatprep.subr.mxu0 0.0
        %616 = vmatpush1.msra.mxu0 0.0
        %617 = vmatprep.subr.mxu0 0.0
        %618 = vmatpush1.msra.mxu0 0.0
        %619 = vmatprep.subr.mxu0 0.0
        %620 = vmatpush1.msra.mxu0 0.0
        %621 = vmatprep.subr.mxu0 0.0
        %622 = vmatpush1.msra.mxu0 0.0
        %623 = vmatprep.subr.mxu0 0.0
        %624 = vmatpush1.msra.mxu0 0.0
        %625 = vmatprep.subr.mxu0 0.0
        %626 = vmatpush1.msra.mxu0 0.0
        %627 = vmatprep.subr.mxu0 0.0
        %628 = vmatpush1.msra.mxu0 0.0
        %629 = vmatprep.subr.mxu0 0.0
        %630 = vmatpush1.msra.mxu0 0.0
        %631 = vmatprep.subr.mxu0 0.0
        %632 = vmatpush1.msra.mxu0 0.0
        %633 = vmatprep.subr.mxu0 0.0
        %634 = vmatpush1.msra.mxu0 0.0
        %635 = vmatprep.subr.mxu0 0.0
        %636 = vmatpush1.msra.mxu0 0.0
        %637 = vmatprep.subr.mxu0 0.0
        %638 = vmatpush1.msra.mxu0 0.0
        %639 = vmatprep.subr.mxu0 0.0
        %640 = vmatpush1.msra.mxu0 0.0
        %641 = vmatprep.mubr.f32.mxu0 0.0
        %642 = vmatmul.mubr.f32.gmra.mrb[0].mxu0 %v575
        %v643 = vpop.f32.mrb[0].mxu0
        %v644 = vadd.f32 0.0, %v643
        %v645 = vpop.f32.mrb[0].mxu0
        %646 = vdwg.mxu0
        %647 = vrot.lane.b32.xlu0 %v469, 112
        %v648 = vpop.permute.xlu0 %647
        %649 = vrot.lane.b32.xlu0 %v469, 48
        %v650 = vpop.permute.xlu0 %649
        %v651 = vsel %vm485, %v648, 0
        %v653 = vsel %vm485, %v650, 0
        %655 = vmatprep.subr.mxu0 0.0
        %656 = vmatpush1.xpose.msra.mxu0 %v653
        %657 = vmatprep.subr.mxu0 0.0
        %658 = vmatpush1.xpose.msra.mxu0 0.0
        %659 = vmatprep.subr.mxu0 0.0
        %660 = vmatpush1.xpose.msra.mxu0 0.0
        %661 = vmatprep.subr.mxu0 0.0
        %662 = vmatpush1.xpose.msra.mxu0 0.0
        %663 = vmatprep.subr.mxu0 0.0
        %664 = vmatpush1.xpose.msra.mxu0 0.0
        %665 = vmatprep.subr.mxu0 0.0
        %666 = vmatpush1.xpose.msra.mxu0 0.0
        %667 = vmatprep.subr.mxu0 0.0
        %668 = vmatpush1.xpose.msra.mxu0 0.0
        %669 = vmatprep.subr.mxu0 0.0
        %670 = vmatpush1.xpose.msra.mxu0 0.0
        %671 = vmatprep.subr.mxu0 0.0
        %672 = vmatpush1.xpose.msra.mxu0 0.0
        %673 = vmatprep.subr.mxu0 0.0
        %674 = vmatpush1.xpose.msra.mxu0 0.0
        %675 = vmatprep.subr.mxu0 0.0
        %676 = vmatpush1.xpose.msra.mxu0 0.0
        %677 = vmatprep.subr.mxu0 0.0
        %678 = vmatpush1.xpose.msra.mxu0 0.0
        %679 = vmatprep.subr.mxu0 0.0
        %680 = vmatpush1.xpose.msra.mxu0 0.0
        %681 = vmatprep.subr.mxu0 0.0
        %682 = vmatpush1.xpose.msra.mxu0 0.0
        %683 = vmatprep.subr.mxu0 0.0
        %684 = vmatpush1.xpose.msra.mxu0 0.0
        %685 = vmatprep.subr.mxu0 0.0
        %686 = vmatpush1.xpose.msra.mxu0 0.0
        %687 = vmatprep.subr.mxu0 0.0
        %688 = vmatpush1.xpose.msra.mxu0 0.0
        %689 = vmatprep.subr.mxu0 0.0
        %690 = vmatpush1.xpose.msra.mxu0 0.0
        %691 = vmatprep.subr.mxu0 0.0
        %692 = vmatpush1.xpose.msra.mxu0 0.0
        %693 = vmatprep.subr.mxu0 0.0
        %694 = vmatpush1.xpose.msra.mxu0 0.0
        %695 = vmatprep.subr.mxu0 0.0
        %696 = vmatpush1.xpose.msra.mxu0 0.0
        %697 = vmatprep.subr.mxu0 0.0
        %698 = vmatpush1.xpose.msra.mxu0 0.0
        %699 = vmatprep.subr.mxu0 0.0
        %700 = vmatpush1.xpose.msra.mxu0 0.0
        %701 = vmatprep.subr.mxu0 0.0
        %702 = vmatpush1.xpose.msra.mxu0 0.0
        %703 = vmatprep.subr.mxu0 0.0
        %704 = vmatpush1.xpose.msra.mxu0 0.0
        %705 = vmatprep.subr.mxu0 0.0
        %706 = vmatpush1.xpose.msra.mxu0 0.0
        %707 = vmatprep.subr.mxu0 0.0
        %708 = vmatpush1.xpose.msra.mxu0 0.0
        %709 = vmatprep.subr.mxu0 0.0
        %710 = vmatpush1.xpose.msra.mxu0 0.0
        %711 = vmatprep.subr.mxu0 0.0
        %712 = vmatpush1.xpose.msra.mxu0 0.0
        %713 = vmatprep.subr.mxu0 0.0
        %714 = vmatpush1.xpose.msra.mxu0 0.0
        %715 = vmatprep.subr.mxu0 0.0
        %716 = vmatpush1.xpose.msra.mxu0 0.0
        %717 = vmatprep.subr.mxu0 0.0
        %718 = vmatpush1.xpose.msra.mxu0 0.0
        %719 = vmatprep.mubr.f32.mxu0 0.0
        %720 = vmatmul.mubr.f32.gmra.mrb[0].mxu0 %v651
        %v721 = vpop.f32.mrb[0].mxu0
        %v722 = vadd.f32 0.0, %v721
        %v723 = vpop.f32.mrb[0].mxu0
        %724 = vdwg.mxu0
        %v725 = vmul.f32 %v722, 0.125
        %v726 = vadd.f32 %v725, %v473
        %v727 = vsel %vm562, %v726, -inf
        %728 = vmax.xlane.f32.xlu0 %v727
        %v729 = vpop.xlane.xlu0 %728
        %v730 = vsub.f32 %v726, %v729
        %v731 = vmul.f32 %v730, 1.442695
        %v732 = vpow.pop %v731
        %v733 = vsel %vm562, %v732, 0.0
        %734 = vadd.xlane.f32.xlu0 %v733
        %v735 = vpop.xlane.xlu0 %734
        %v736 = vrcp.pop %v735
        %v737 = vmul.f32 %v732, %v736
        %739 = vrot.lane.b32.xlu0 %v471, 112
        %v740 = vpop.permute.xlu0 %739
        %v743 = vsel %vm562, %v737, 0
        %745 = vmatprep.subr.mxu0 0.0
        %746 = vmatpush1.msra.mxu0 %v740
        %747 = vmatprep.subr.mxu0 0.0
        %748 = vmatpush1.msra.mxu0 0.0
        %749 = vmatprep.subr.mxu0 0.0
        %750 = vmatpush1.msra.mxu0 0.0
        %751 = vmatprep.subr.mxu0 0.0
        %752 = vmatpush1.msra.mxu0 0.0
        %753 = vmatprep.subr.mxu0 0.0
        %754 = vmatpush1.msra.mxu0 0.0
        %755 = vmatprep.subr.mxu0 0.0
        %756 = vmatpush1.msra.mxu0 0.0
        %757 = vmatprep.subr.mxu0 0.0
        %758 = vmatpush1.msra.mxu0 0.0
        %759 = vmatprep.subr.mxu0 0.0
        %760 = vmatpush1.msra.mxu0 0.0
        %761 = vmatprep.subr.mxu0 0.0
        %762 = vmatpush1.msra.mxu0 0.0
        %763 = vmatprep.subr.mxu0 0.0
        %764 = vmatpush1.msra.mxu0 0.0
        %765 = vmatprep.subr.mxu0 0.0
        %766 = vmatpush1.msra.mxu0 0.0
        %767 = vmatprep.subr.mxu0 0.0
        %768 = vmatpush1.msra.mxu0 0.0
        %769 = vmatprep.subr.mxu0 0.0
        %770 = vmatpush1.msra.mxu0 0.0
        %771 = vmatprep.subr.mxu0 0.0
        %772 = vmatpush1.msra.mxu0 0.0
        %773 = vmatprep.subr.mxu0 0.0
        %774 = vmatpush1.msra.mxu0 0.0
        %775 = vmatprep.subr.mxu0 0.0
        %776 = vmatpush1.msra.mxu0 0.0
        %777 = vmatprep.subr.mxu0 0.0
        %778 = vmatpush1.msra.mxu0 0.0
        %779 = vmatprep.subr.mxu0 0.0
        %780 = vmatpush1.msra.mxu0 0.0
        %781 = vmatprep.subr.mxu0 0.0
        %782 = vmatpush1.msra.mxu0 0.0
        %783 = vmatprep.subr.mxu0 0.0
        %784 = vmatpush1.msra.mxu0 0.0
        %785 = vmatprep.subr.mxu0 0.0
        %786 = vmatpush1.msra.mxu0 0.0
        %787 = vmatprep.subr.mxu0 0.0
        %788 = vmatpush1.msra.mxu0 0.0
        %789 = vmatprep.subr.mxu0 0.0
        %790 = vmatpush1.msra.mxu0 0.0
        %791 = vmatprep.subr.mxu0 0.0
        %792 = vmatpush1.msra.mxu0 0.0
        %793 = vmatprep.subr.mxu0 0.0
        %794 = vmatpush1.msra.mxu0 0.0
        %795 = vmatprep.subr.mxu0 0.0
        %796 = vmatpush1.msra.mxu0 0.0
        %797 = vmatprep.subr.mxu0 0.0
        %798 = vmatpush1.msra.mxu0 0.0
        %799 = vmatprep.subr.mxu0 0.0
        %800 = vmatpush1.msra.mxu0 0.0
        %801 = vmatprep.subr.mxu0 0.0
        %802 = vmatpush1.msra.mxu0 0.0
        %803 = vmatprep.subr.mxu0 0.0
        %804 = vmatpush1.msra.mxu0 0.0
        %805 = vmatprep.subr.mxu0 0.0
        %806 = vmatpush1.msra.mxu0 0.0
        %807 = vmatprep.subr.mxu0 0.0
        %808 = vmatpush1.msra.mxu0 0.0
        %809 = vmatprep.mubr.f32.mxu0 0.0
        %810 = vmatmul.mubr.f32.gmra.mrb[0].mxu0 %v743
        %v811 = vpop.f32.mrb[0].mxu0
        %v812 = vadd.f32 0.0, %v811
        %v813 = vpop.f32.mrb[0].mxu0
        %814 = vdwg.mxu0
        %v816 = vsel %vm485, %v812, 0
        %818 = vmatprep.subr.mxu0 0.0
        %819 = vmatpush1.msra.mxu0 %v476
        %820 = vmatprep.subr.mxu0 0.0
        %821 = vmatpush1.msra.mxu0 %v477
        %822 = vmatprep.subr.mxu0 0.0
        %823 = vmatpush1.msra.mxu0 0.0
        %824 = vmatprep.subr.mxu0 0.0
        %825 = vmatpush1.msra.mxu0 0.0
        %826 = vmatprep.subr.mxu0 0.0
        %827 = vmatpush1.msra.mxu0 0.0
        %828 = vmatprep.subr.mxu0 0.0
        %829 = vmatpush1.msra.mxu0 0.0
        %830 = vmatprep.subr.mxu0 0.0
        %831 = vmatpush1.msra.mxu0 0.0
        %832 = vmatprep.subr.mxu0 0.0
        %833 = vmatpush1.msra.mxu0 0.0
        %834 = vmatprep.subr.mxu0 0.0
        %835 = vmatpush1.msra.mxu0 0.0
        %836 = vmatprep.subr.mxu0 0.0
        %837 = vmatpush1.msra.mxu0 0.0
        %838 = vmatprep.subr.mxu0 0.0
        %839 = vmatpush1.msra.mxu0 0.0
        %840 = vmatprep.subr.mxu0 0.0
        %841 = vmatpush1.msra.mxu0 0.0
        %842 = vmatprep.subr.mxu0 0.0
        %843 = vmatpush1.msra.mxu0 0.0
        %844 = vmatprep.subr.mxu0 0.0
        %845 = vmatpush1.msra.mxu0 0.0
        %846 = vmatprep.subr.mxu0 0.0
        %847 = vmatpush1.msra.mxu0 0.0
        %848 = vmatprep.subr.mxu0 0.0
        %849 = vmatpush1.msra.mxu0 0.0
        %850 = vmatprep.subr.mxu0 0.0
        %851 = vmatpush1.msra.mxu0 0.0
        %852 = vmatprep.subr.mxu0 0.0
        %853 = vmatpush1.msra.mxu0 0.0
        %854 = vmatprep.subr.mxu0 0.0
        %855 = vmatpush1.msra.mxu0 0.0
        %856 = vmatprep.subr.mxu0 0.0
        %857 = vmatpush1.msra.mxu0 0.0
        %858 = vmatprep.subr.mxu0 0.0
        %859 = vmatpush1.msra.mxu0 0.0
        %860 = vmatprep.subr.mxu0 0.0
        %861 = vmatpush1.msra.mxu0 0.0
        %862 = vmatprep.subr.mxu0 0.0
        %863 = vmatpush1.msra.mxu0 0.0
        %864 = vmatprep.subr.mxu0 0.0
        %865 = vmatpush1.msra.mxu0 0.0
        %866 = vmatprep.subr.mxu0 0.0
        %867 = vmatpush1.msra.mxu0 0.0
        %868 = vmatprep.subr.mxu0 0.0
        %869 = vmatpush1.msra.mxu0 0.0
        %870 = vmatprep.subr.mxu0 0.0
        %871 = vmatpush1.msra.mxu0 0.0
        %872 = vmatprep.subr.mxu0 0.0
        %873 = vmatpush1.msra.mxu0 0.0
        %874 = vmatprep.subr.mxu0 0.0
        %875 = vmatpush1.msra.mxu0 0.0
        %876 = vmatprep.subr.mxu0 0.0
        %877 = vmatpush1.msra.mxu0 0.0
        %878 = vmatprep.subr.mxu0 0.0
        %879 = vmatpush1.msra.mxu0 0.0
        %880 = vmatprep.subr.mxu0 0.0
        %881 = vmatpush1.msra.mxu0 0.0
        %882 = vmatprep.mubr.f32.mxu0 0.0
        %883 = vmatmul.mubr.f32.gmra.mrb[0].mxu0 %v816
        %v884 = vpop.f32.mrb[0].mxu0
        %v885 = vadd.f32 0.0, %v884
        %v886 = vpop.f32.mrb[0].mxu0
        %887 = vdwg.mxu0
        %v889 = vsel %vm485, %v644, 0
        %891 = vmatprep.subr.mxu0 0.0
        %892 = vmatpush1.msra.mxu0 %v474
        %893 = vmatprep.subr.mxu0 0.0
        %894 = vmatpush1.msra.mxu0 %v475
        %895 = vmatprep.subr.mxu0 0.0
        %896 = vmatpush1.msra.mxu0 0.0
        %897 = vmatprep.subr.mxu0 0.0
        %898 = vmatpush1.msra.mxu0 0.0
        %899 = vmatprep.subr.mxu0 0.0
        %900 = vmatpush1.msra.mxu0 0.0
        %901 = vmatprep.subr.mxu0 0.0
        %902 = vmatpush1.msra.mxu0 0.0
        %903 = vmatprep.subr.mxu0 0.0
        %904 = vmatpush1.msra.mxu0 0.0
        %905 = vmatprep.subr.mxu0 0.0
        %906 = vmatpush1.msra.mxu0 0.0
        %907 = vmatprep.subr.mxu0 0.0
        %908 = vmatpush1.msra.mxu0 0.0
        %909 = vmatprep.subr.mxu0 0.0
        %910 = vmatpush1.msra.mxu0 0.0
        %911 = vmatprep.subr.mxu0 0.0
        %912 = vmatpush1.msra.mxu0 0.0
        %913 = vmatprep.subr.mxu0 0.0
        %914 = vmatpush1.msra.mxu0 0.0
        %915 = vmatprep.subr.mxu0 0.0
        %916 = vmatpush1.msra.mxu0 0.0
        %917 = vmatprep.subr.mxu0 0.0
        %918 = vmatpush1.msra.mxu0 0.0
        %919 = vmatprep.subr.mxu0 0.0
        %920 = vmatpush1.msra.mxu0 0.0
        %921 = vmatprep.subr.mxu0 0.0
        %922 = vmatpush1.msra.mxu0 0.0
        %923 = vmatprep.subr.mxu0 0.0
        %924 = vmatpush1.msra.mxu0 0.0
        %925 = vmatprep.subr.mxu0 0.0
        %926 = vmatpush1.msra.mxu0 0.0
        %927 = vmatprep.subr.mxu0 0.0
        %928 = vmatpush1.msra.mxu0 0.0
        %929 = vmatprep.subr.mxu0 0.0
        %930 = vmatpush1.msra.mxu0 0.0
        %931 = vmatprep.subr.mxu0 0.0
        %932 = vmatpush1.msra.mxu0 0.0
        %933 = vmatprep.subr.mxu0 0.0
        %934 = vmatpush1.msra.mxu0 0.0
        %935 = vmatprep.subr.mxu0 0.0
        %936 = vmatpush1.msra.mxu0 0.0
        %937 = vmatprep.subr.mxu0 0.0
        %938 = vmatpush1.msra.mxu0 0.0
        %939 = vmatprep.subr.mxu0 0.0
        %940 = vmatpush1.msra.mxu0 0.0
        %941 = vmatprep.subr.mxu0 0.0
        %942 = vmatpush1.msra.mxu0 0.0
        %943 = vmatprep.subr.mxu0 0.0
        %944 = vmatpush1.msra.mxu0 0.0
        %945 = vmatprep.subr.mxu0 0.0
        %946 = vmatpush1.msra.mxu0 0.0
        %947 = vmatprep.subr.mxu0 0.0
        %948 = vmatpush1.msra.mxu0 0.0
        %949 = vmatprep.subr.mxu0 0.0
        %950 = vmatpush1.msra.mxu0 0.0
        %951 = vmatprep.subr.mxu0 0.0
        %952 = vmatpush1.msra.mxu0 0.0
        %953 = vmatprep.subr.mxu0 0.0
        %954 = vmatpush1.msra.mxu0 0.0
        %955 = vmatprep.mubr.f32.mxu0 0.0
        %956 = vmatmul.mubr.f32.gmra.mrb[0].mxu0 %v889
        %v957 = vpop.f32.mrb[0].mxu0
        %v958 = vadd.f32 %v885, %v957
        %v959 = vpop.f32.mrb[0].mxu0
        %960 = vdwg.mxu0
        %961 = vrot.lane.b32.xlu0 %v469, 96
        %v962 = vpop.permute.xlu0 %961
        %963 = vrot.lane.b32.xlu0 %v469, 32
        %v964 = vpop.permute.xlu0 %963
        %v965 = vsel %vm485, %v962, 0
        %v967 = vsel %vm485, %v964, 0
        %969 = vmatprep.subr.mxu0 0.0
        %970 = vmatpush1.xpose.msra.mxu0 %v967
        %971 = vmatprep.subr.mxu0 0.0
        %972 = vmatpush1.xpose.msra.mxu0 0.0
        %973 = vmatprep.subr.mxu0 0.0
        %974 = vmatpush1.xpose.msra.mxu0 0.0
        %975 = vmatprep.subr.mxu0 0.0
        %976 = vmatpush1.xpose.msra.mxu0 0.0
        %977 = vmatprep.subr.mxu0 0.0
        %978 = vmatpush1.xpose.msra.mxu0 0.0
        %979 = vmatprep.subr.mxu0 0.0
        %980 = vmatpush1.xpose.msra.mxu0 0.0
        %981 = vmatprep.subr.mxu0 0.0
        %982 = vmatpush1.xpose.msra.mxu0 0.0
        %983 = vmatprep.subr.mxu0 0.0
        %984 = vmatpush1.xpose.msra.mxu0 0.0
        %985 = vmatprep.subr.mxu0 0.0
        %986 = vmatpush1.xpose.msra.mxu0 0.0
        %987 = vmatprep.subr.mxu0 0.0
        %988 = vmatpush1.xpose.msra.mxu0 0.0
        %989 = vmatprep.subr.mxu0 0.0
        %990 = vmatpush1.xpose.msra.mxu0 0.0
        %991 = vmatprep.subr.mxu0 0.0
        %992 = vmatpush1.xpose.msra.mxu0 0.0
        %993 = vmatprep.subr.mxu0 0.0
        %994 = vmatpush1.xpose.msra.mxu0 0.0
        %995 = vmatprep.subr.mxu0 0.0
        %996 = vmatpush1.xpose.msra.mxu0 0.0
        %997 = vmatprep.subr.mxu0 0.0
        %998 = vmatpush1.xpose.msra.mxu0 0.0
        %999 = vmatprep.subr.mxu0 0.0
        %1000 = vmatpush1.xpose.msra.mxu0 0.0
        %1001 = vmatprep.subr.mxu0 0.0
        %1002 = vmatpush1.xpose.msra.mxu0 0.0
        %1003 = vmatprep.subr.mxu0 0.0
        %1004 = vmatpush1.xpose.msra.mxu0 0.0
        %1005 = vmatprep.subr.mxu0 0.0
        %1006 = vmatpush1.xpose.msra.mxu0 0.0
        %1007 = vmatprep.subr.mxu0 0.0
        %1008 = vmatpush1.xpose.msra.mxu0 0.0
        %1009 = vmatprep.subr.mxu0 0.0
        %1010 = vmatpush1.xpose.msra.mxu0 0.0
        %1011 = vmatprep.subr.mxu0 0.0
        %1012 = vmatpush1.xpose.msra.mxu0 0.0
        %1013 = vmatprep.subr.mxu0 0.0
        %1014 = vmatpush1.xpose.msra.mxu0 0.0
        %1015 = vmatprep.subr.mxu0 0.0
        %1016 = vmatpush1.xpose.msra.mxu0 0.0
        %1017 = vmatprep.subr.mxu0 0.0
        %1018 = vmatpush1.xpose.msra.mxu0 0.0
        %1019 = vmatprep.subr.mxu0 0.0
        %1020 = vmatpush1.xpose.msra.mxu0 0.0
        %1021 = vmatprep.subr.mxu0 0.0
        %1022 = vmatpush1.xpose.msra.mxu0 0.0
        %1023 = vmatprep.subr.mxu0 0.0
        %1024 = vmatpush1.xpose.msra.mxu0 0.0
        %1025 = vmatprep.subr.mxu0 0.0
        %1026 = vmatpush1.xpose.msra.mxu0 0.0
        %1027 = vmatprep.subr.mxu0 0.0
        %1028 = vmatpush1.xpose.msra.mxu0 0.0
        %1029 = vmatprep.subr.mxu0 0.0
        %1030 = vmatpush1.xpose.msra.mxu0 0.0
        %1031 = vmatprep.subr.mxu0 0.0
        %1032 = vmatpush1.xpose.msra.mxu0 0.0
        %1033 = vmatprep.mubr.f32.mxu0 0.0
        %1034 = vmatmul.mubr.f32.gmra.mrb[0].mxu0 %v965
        %v1035 = vpop.f32.mrb[0].mxu0
        %v1036 = vadd.f32 0.0, %v1035
        %v1037 = vpop.f32.mrb[0].mxu0
        %1038 = vdwg.mxu0
        %v1039 = vmul.f32 %v1036, 0.125
        %v1040 = vadd.f32 %v1039, %v473
        %v1041 = vsel %vm562, %v1040, -inf
        %1042 = vmax.xlane.f32.xlu0 %v1041
        %v1043 = vpop.xlane.xlu0 %1042
        %v1044 = vsub.f32 %v1040, %v1043
        %v1045 = vmul.f32 %v1044, 1.442695
        %v1046 = vpow.pop %v1045
        %v1047 = vsel %vm562, %v1046, 0.0
        %1048 = vadd.xlane.f32.xlu0 %v1047
        %v1049 = vpop.xlane.xlu0 %1048
        %v1050 = vrcp.pop %v1049
        %v1051 = vmul.f32 %v1046, %v1050
        %1052 = vrot.lane.b32.xlu0 %v471, 96
        %v1053 = vpop.permute.xlu0 %1052
        %v1056 = vsel %vm562, %v1051, 0
        %1058 = vmatprep.subr.mxu0 0.0
        %1059 = vmatpush1.msra.mxu0 %v1053
        %1060 = vmatprep.subr.mxu0 0.0
        %1061 = vmatpush1.msra.mxu0 0.0
        %1062 = vmatprep.subr.mxu0 0.0
        %1063 = vmatpush1.msra.mxu0 0.0
        %1064 = vmatprep.subr.mxu0 0.0
        %1065 = vmatpush1.msra.mxu0 0.0
        %1066 = vmatprep.subr.mxu0 0.0
        %1067 = vmatpush1.msra.mxu0 0.0
        %1068 = vmatprep.subr.mxu0 0.0
        %1069 = vmatpush1.msra.mxu0 0.0
        %1070 = vmatprep.subr.mxu0 0.0
        %1071 = vmatpush1.msra.mxu0 0.0
        %1072 = vmatprep.subr.mxu0 0.0
        %1073 = vmatpush1.msra.mxu0 0.0
        %1074 = vmatprep.subr.mxu0 0.0
        %1075 = vmatpush1.msra.mxu0 0.0
        %1076 = vmatprep.subr.mxu0 0.0
        %1077 = vmatpush1.msra.mxu0 0.0
        %1078 = vmatprep.subr.mxu0 0.0
        %1079 = vmatpush1.msra.mxu0 0.0
        %1080 = vmatprep.subr.mxu0 0.0
        %1081 = vmatpush1.msra.mxu0 0.0
        %1082 = vmatprep.subr.mxu0 0.0
        %1083 = vmatpush1.msra.mxu0 0.0
        %1084 = vmatprep.subr.mxu0 0.0
        %1085 = vmatpush1.msra.mxu0 0.0
        %1086 = vmatprep.subr.mxu0 0.0
        %1087 = vmatpush1.msra.mxu0 0.0
        %1088 = vmatprep.subr.mxu0 0.0
        %1089 = vmatpush1.msra.mxu0 0.0
        %1090 = vmatprep.subr.mxu0 0.0
        %1091 = vmatpush1.msra.mxu0 0.0
        %1092 = vmatprep.subr.mxu0 0.0
        %1093 = vmatpush1.msra.mxu0 0.0
        %1094 = vmatprep.subr.mxu0 0.0
        %1095 = vmatpush1.msra.mxu0 0.0
        %1096 = vmatprep.subr.mxu0 0.0
        %1097 = vmatpush1.msra.mxu0 0.0
        %1098 = vmatprep.subr.mxu0 0.0
        %1099 = vmatpush1.msra.mxu0 0.0
        %1100 = vmatprep.subr.mxu0 0.0
        %1101 = vmatpush1.msra.mxu0 0.0
        %1102 = vmatprep.subr.mxu0 0.0
        %1103 = vmatpush1.msra.mxu0 0.0
        %1104 = vmatprep.subr.mxu0 0.0
        %1105 = vmatpush1.msra.mxu0 0.0
        %1106 = vmatprep.subr.mxu0 0.0
        %1107 = vmatpush1.msra.mxu0 0.0
        %1108 = vmatprep.subr.mxu0 0.0
        %1109 = vmatpush1.msra.mxu0 0.0
        %1110 = vmatprep.subr.mxu0 0.0
        %1111 = vmatpush1.msra.mxu0 0.0
        %1112 = vmatprep.subr.mxu0 0.0
        %1113 = vmatpush1.msra.mxu0 0.0
        %1114 = vmatprep.subr.mxu0 0.0
        %1115 = vmatpush1.msra.mxu0 0.0
        %1116 = vmatprep.subr.mxu0 0.0
        %1117 = vmatpush1.msra.mxu0 0.0
        %1118 = vmatprep.subr.mxu0 0.0
        %1119 = vmatpush1.msra.mxu0 0.0
        %1120 = vmatprep.subr.mxu0 0.0
        %1121 = vmatpush1.msra.mxu0 0.0
        %1122 = vmatprep.mubr.f32.mxu0 0.0
        %1123 = vmatmul.mubr.f32.gmra.mrb[0].mxu0 %v1056
        %v1124 = vpop.f32.mrb[0].mxu0
        %v1125 = vadd.f32 0.0, %v1124
        %v1126 = vpop.f32.mrb[0].mxu0
        %1127 = vdwg.mxu0
        %v1129 = vsel %vm485, %v1125, 0
        %1131 = vmatprep.subr.mxu0 0.0
        %1132 = vmatpush1.msra.mxu0 %v478
        %1133 = vmatprep.subr.mxu0 0.0
        %1134 = vmatpush1.msra.mxu0 %v479
        %1135 = vmatprep.subr.mxu0 0.0
        %1136 = vmatpush1.msra.mxu0 0.0
        %1137 = vmatprep.subr.mxu0 0.0
        %1138 = vmatpush1.msra.mxu0 0.0
        %1139 = vmatprep.subr.mxu0 0.0
        %1140 = vmatpush1.msra.mxu0 0.0
        %1141 = vmatprep.subr.mxu0 0.0
        %1142 = vmatpush1.msra.mxu0 0.0
        %1143 = vmatprep.subr.mxu0 0.0
        %1144 = vmatpush1.msra.mxu0 0.0
        %1145 = vmatprep.subr.mxu0 0.0
        %1146 = vmatpush1.msra.mxu0 0.0
        %1147 = vmatprep.subr.mxu0 0.0
        %1148 = vmatpush1.msra.mxu0 0.0
        %1149 = vmatprep.subr.mxu0 0.0
        %1150 = vmatpush1.msra.mxu0 0.0
        %1151 = vmatprep.subr.mxu0 0.0
        %1152 = vmatpush1.msra.mxu0 0.0
        %1153 = vmatprep.subr.mxu0 0.0
        %1154 = vmatpush1.msra.mxu0 0.0
        %1155 = vmatprep.subr.mxu0 0.0
        %1156 = vmatpush1.msra.mxu0 0.0
        %1157 = vmatprep.subr.mxu0 0.0
        %1158 = vmatpush1.msra.mxu0 0.0
        %1159 = vmatprep.subr.mxu0 0.0
        %1160 = vmatpush1.msra.mxu0 0.0
        %1161 = vmatprep.subr.mxu0 0.0
        %1162 = vmatpush1.msra.mxu0 0.0
        %1163 = vmatprep.subr.mxu0 0.0
        %1164 = vmatpush1.msra.mxu0 0.0
        %1165 = vmatprep.subr.mxu0 0.0
        %1166 = vmatpush1.msra.mxu0 0.0
        %1167 = vmatprep.subr.mxu0 0.0
        %1168 = vmatpush1.msra.mxu0 0.0
        %1169 = vmatprep.subr.mxu0 0.0
        %1170 = vmatpush1.msra.mxu0 0.0
        %1171 = vmatprep.subr.mxu0 0.0
        %1172 = vmatpush1.msra.mxu0 0.0
        %1173 = vmatprep.subr.mxu0 0.0
        %1174 = vmatpush1.msra.mxu0 0.0
        %1175 = vmatprep.subr.mxu0 0.0
        %1176 = vmatpush1.msra.mxu0 0.0
        %1177 = vmatprep.subr.mxu0 0.0
        %1178 = vmatpush1.msra.mxu0 0.0
        %1179 = vmatprep.subr.mxu0 0.0
        %1180 = vmatpush1.msra.mxu0 0.0
        %1181 = vmatprep.subr.mxu0 0.0
        %1182 = vmatpush1.msra.mxu0 0.0
        %1183 = vmatprep.subr.mxu0 0.0
        %1184 = vmatpush1.msra.mxu0 0.0
        %1185 = vmatprep.subr.mxu0 0.0
        %1186 = vmatpush1.msra.mxu0 0.0
        %1187 = vmatprep.subr.mxu0 0.0
        %1188 = vmatpush1.msra.mxu0 0.0
        %1189 = vmatprep.subr.mxu0 0.0
        %1190 = vmatpush1.msra.mxu0 0.0
        %1191 = vmatprep.subr.mxu0 0.0
        %1192 = vmatpush1.msra.mxu0 0.0
        %1193 = vmatprep.subr.mxu0 0.0
        %1194 = vmatpush1.msra.mxu0 0.0
        %1195 = vmatprep.mubr.f32.mxu0 0.0
        %1196 = vmatmul.mubr.f32.gmra.mrb[0].mxu0 %v1129
        %v1197 = vpop.f32.mrb[0].mxu0
        %v1198 = vadd.f32 0.0, %v1197
        %v1199 = vpop.f32.mrb[0].mxu0
        %1200 = vdwg.mxu0
        %v1201 = vadd.f32 %v958, %v1198
        %1202 = vrot.lane.b32.xlu0 %v469, 80
        %v1203 = vpop.permute.xlu0 %1202
        %1204 = vrot.lane.b32.xlu0 %v469, 16
        %v1205 = vpop.permute.xlu0 %1204
        %v1206 = vsel %vm485, %v1203, 0
        %v1208 = vsel %vm485, %v1205, 0
        %1210 = vmatprep.subr.mxu0 0.0
        %1211 = vmatpush1.xpose.msra.mxu0 %v1208
        %1212 = vmatprep.subr.mxu0 0.0
        %1213 = vmatpush1.xpose.msra.mxu0 0.0
        %1214 = vmatprep.subr.mxu0 0.0
        %1215 = vmatpush1.xpose.msra.mxu0 0.0
        %1216 = vmatprep.subr.mxu0 0.0
        %1217 = vmatpush1.xpose.msra.mxu0 0.0
        %1218 = vmatprep.subr.mxu0 0.0
        %1219 = vmatpush1.xpose.msra.mxu0 0.0
        %1220 = vmatprep.subr.mxu0 0.0
        %1221 = vmatpush1.xpose.msra.mxu0 0.0
        %1222 = vmatprep.subr.mxu0 0.0
        %1223 = vmatpush1.xpose.msra.mxu0 0.0
        %1224 = vmatprep.subr.mxu0 0.0
        %1225 = vmatpush1.xpose.msra.mxu0 0.0
        %1226 = vmatprep.subr.mxu0 0.0
        %1227 = vmatpush1.xpose.msra.mxu0 0.0
        %1228 = vmatprep.subr.mxu0 0.0
        %1229 = vmatpush1.xpose.msra.mxu0 0.0
        %1230 = vmatprep.subr.mxu0 0.0
        %1231 = vmatpush1.xpose.msra.mxu0 0.0
        %1232 = vmatprep.subr.mxu0 0.0
        %1233 = vmatpush1.xpose.msra.mxu0 0.0
        %1234 = vmatprep.subr.mxu0 0.0
        %1235 = vmatpush1.xpose.msra.mxu0 0.0
        %1236 = vmatprep.subr.mxu0 0.0
        %1237 = vmatpush1.xpose.msra.mxu0 0.0
        %1238 = vmatprep.subr.mxu0 0.0
        %1239 = vmatpush1.xpose.msra.mxu0 0.0
        %1240 = vmatprep.subr.mxu0 0.0
        %1241 = vmatpush1.xpose.msra.mxu0 0.0
        %1242 = vmatprep.subr.mxu0 0.0
        %1243 = vmatpush1.xpose.msra.mxu0 0.0
        %1244 = vmatprep.subr.mxu0 0.0
        %1245 = vmatpush1.xpose.msra.mxu0 0.0
        %1246 = vmatprep.subr.mxu0 0.0
        %1247 = vmatpush1.xpose.msra.mxu0 0.0
        %1248 = vmatprep.subr.mxu0 0.0
        %1249 = vmatpush1.xpose.msra.mxu0 0.0
        %1250 = vmatprep.subr.mxu0 0.0
        %1251 = vmatpush1.xpose.msra.mxu0 0.0
        %1252 = vmatprep.subr.mxu0 0.0
        %1253 = vmatpush1.xpose.msra.mxu0 0.0
        %1254 = vmatprep.subr.mxu0 0.0
        %1255 = vmatpush1.xpose.msra.mxu0 0.0
        %1256 = vmatprep.subr.mxu0 0.0
        %1257 = vmatpush1.xpose.msra.mxu0 0.0
        %1258 = vmatprep.subr.mxu0 0.0
        %1259 = vmatpush1.xpose.msra.mxu0 0.0
        %1260 = vmatprep.subr.mxu0 0.0
        %1261 = vmatpush1.xpose.msra.mxu0 0.0
        %1262 = vmatprep.subr.mxu0 0.0
        %1263 = vmatpush1.xpose.msra.mxu0 0.0
        %1264 = vmatprep.subr.mxu0 0.0
        %1265 = vmatpush1.xpose.msra.mxu0 0.0
        %1266 = vmatprep.subr.mxu0 0.0
        %1267 = vmatpush1.xpose.msra.mxu0 0.0
        %1268 = vmatprep.subr.mxu0 0.0
        %1269 = vmatpush1.xpose.msra.mxu0 0.0
        %1270 = vmatprep.subr.mxu0 0.0
        %1271 = vmatpush1.xpose.msra.mxu0 0.0
        %1272 = vmatprep.subr.mxu0 0.0
        %1273 = vmatpush1.xpose.msra.mxu0 0.0
        %1274 = vmatprep.mubr.f32.mxu0 0.0
        %1275 = vmatmul.mubr.f32.gmra.mrb[0].mxu0 %v1206
        %v1276 = vpop.f32.mrb[0].mxu0
        %v1277 = vadd.f32 0.0, %v1276
        %v1278 = vpop.f32.mrb[0].mxu0
        %1279 = vdwg.mxu0
        %v1280 = vmul.f32 %v1277, 0.125
        %v1281 = vadd.f32 %v1280, %v473
        %v1282 = vsel %vm562, %v1281, -inf
        %1283 = vmax.xlane.f32.xlu0 %v1282
        %v1284 = vpop.xlane.xlu0 %1283
        %v1285 = vsub.f32 %v1281, %v1284
        %v1286 = vmul.f32 %v1285, 1.442695
        %v1287 = vpow.pop %v1286
        %v1288 = vsel %vm562, %v1287, 0.0
        %1289 = vadd.xlane.f32.xlu0 %v1288
        %v1290 = vpop.xlane.xlu0 %1289
        %v1291 = vrcp.pop %v1290
        %v1292 = vmul.f32 %v1287, %v1291
        %1293 = vrot.lane.b32.xlu0 %v471, 80
        %v1294 = vpop.permute.xlu0 %1293
        %v1297 = vsel %vm562, %v1292, 0
        %1299 = vmatprep.subr.mxu0 0.0
        %1300 = vmatpush1.msra.mxu0 %v1294
        %1301 = vmatprep.subr.mxu0 0.0
        %1302 = vmatpush1.msra.mxu0 0.0
        %1303 = vmatprep.subr.mxu0 0.0
        %1304 = vmatpush1.msra.mxu0 0.0
        %1305 = vmatprep.subr.mxu0 0.0
        %1306 = vmatpush1.msra.mxu0 0.0
        %1307 = vmatprep.subr.mxu0 0.0
        %1308 = vmatpush1.msra.mxu0 0.0
        %1309 = vmatprep.subr.mxu0 0.0
        %1310 = vmatpush1.msra.mxu0 0.0
        %1311 = vmatprep.subr.mxu0 0.0
        %1312 = vmatpush1.msra.mxu0 0.0
        %1313 = vmatprep.subr.mxu0 0.0
        %1314 = vmatpush1.msra.mxu0 0.0
        %1315 = vmatprep.subr.mxu0 0.0
        %1316 = vmatpush1.msra.mxu0 0.0
        %1317 = vmatprep.subr.mxu0 0.0
        %1318 = vmatpush1.msra.mxu0 0.0
        %1319 = vmatprep.subr.mxu0 0.0
        %1320 = vmatpush1.msra.mxu0 0.0
        %1321 = vmatprep.subr.mxu0 0.0
        %1322 = vmatpush1.msra.mxu0 0.0
        %1323 = vmatprep.subr.mxu0 0.0
        %1324 = vmatpush1.msra.mxu0 0.0
        %1325 = vmatprep.subr.mxu0 0.0
        %1326 = vmatpush1.msra.mxu0 0.0
        %1327 = vmatprep.subr.mxu0 0.0
        %1328 = vmatpush1.msra.mxu0 0.0
        %1329 = vmatprep.subr.mxu0 0.0
        %1330 = vmatpush1.msra.mxu0 0.0
        %1331 = vmatprep.subr.mxu0 0.0
        %1332 = vmatpush1.msra.mxu0 0.0
        %1333 = vmatprep.subr.mxu0 0.0
        %1334 = vmatpush1.msra.mxu0 0.0
        %1335 = vmatprep.subr.mxu0 0.0
        %1336 = vmatpush1.msra.mxu0 0.0
        %1337 = vmatprep.subr.mxu0 0.0
        %1338 = vmatpush1.msra.mxu0 0.0
        %1339 = vmatprep.subr.mxu0 0.0
        %1340 = vmatpush1.msra.mxu0 0.0
        %1341 = vmatprep.subr.mxu0 0.0
        %1342 = vmatpush1.msra.mxu0 0.0
        %1343 = vmatprep.subr.mxu0 0.0
        %1344 = vmatpush1.msra.mxu0 0.0
        %1345 = vmatprep.subr.mxu0 0.0
        %1346 = vmatpush1.msra.mxu0 0.0
        %1347 = vmatprep.subr.mxu0 0.0
        %1348 = vmatpush1.msra.mxu0 0.0
        %1349 = vmatprep.subr.mxu0 0.0
        %1350 = vmatpush1.msra.mxu0 0.0
        %1351 = vmatprep.subr.mxu0 0.0
        %1352 = vmatpush1.msra.mxu0 0.0
        %1353 = vmatprep.subr.mxu0 0.0
        %1354 = vmatpush1.msra.mxu0 0.0
        %1355 = vmatprep.subr.mxu0 0.0
        %1356 = vmatpush1.msra.mxu0 0.0
        %1357 = vmatprep.subr.mxu0 0.0
        %1358 = vmatpush1.msra.mxu0 0.0
        %1359 = vmatprep.subr.mxu0 0.0
        %1360 = vmatpush1.msra.mxu0 0.0
        %1361 = vmatprep.subr.mxu0 0.0
        %1362 = vmatpush1.msra.mxu0 0.0
        %1363 = vmatprep.mubr.f32.mxu0 0.0
        %1364 = vmatmul.mubr.f32.gmra.mrb[0].mxu0 %v1297
        %v1365 = vpop.f32.mrb[0].mxu0
        %v1366 = vadd.f32 0.0, %v1365
        %v1367 = vpop.f32.mrb[0].mxu0
        %1368 = vdwg.mxu0
        %v1370 = vsel %vm485, %v1366, 0
        %1372 = vmatprep.subr.mxu0 0.0
        %1373 = vmatpush1.msra.mxu0 %v480
        %1374 = vmatprep.subr.mxu0 0.0
        %1375 = vmatpush1.msra.mxu0 %v481
        %1376 = vmatprep.subr.mxu0 0.0
        %1377 = vmatpush1.msra.mxu0 0.0
        %1378 = vmatprep.subr.mxu0 0.0
        %1379 = vmatpush1.msra.mxu0 0.0
        %1380 = vmatprep.subr.mxu0 0.0
        %1381 = vmatpush1.msra.mxu0 0.0
        %1382 = vmatprep.subr.mxu0 0.0
        %1383 = vmatpush1.msra.mxu0 0.0
        %1384 = vmatprep.subr.mxu0 0.0
        %1385 = vmatpush1.msra.mxu0 0.0
        %1386 = vmatprep.subr.mxu0 0.0
        %1387 = vmatpush1.msra.mxu0 0.0
        %1388 = vmatprep.subr.mxu0 0.0
        %1389 = vmatpush1.msra.mxu0 0.0
        %1390 = vmatprep.subr.mxu0 0.0
        %1391 = vmatpush1.msra.mxu0 0.0
        %1392 = vmatprep.subr.mxu0 0.0
        %1393 = vmatpush1.msra.mxu0 0.0
        %1394 = vmatprep.subr.mxu0 0.0
        %1395 = vmatpush1.msra.mxu0 0.0
        %1396 = vmatprep.subr.mxu0 0.0
        %1397 = vmatpush1.msra.mxu0 0.0
        %1398 = vmatprep.subr.mxu0 0.0
        %1399 = vmatpush1.msra.mxu0 0.0
        %1400 = vmatprep.subr.mxu0 0.0
        %1401 = vmatpush1.msra.mxu0 0.0
        %1402 = vmatprep.subr.mxu0 0.0
        %1403 = vmatpush1.msra.mxu0 0.0
        %1404 = vmatprep.subr.mxu0 0.0
        %1405 = vmatpush1.msra.mxu0 0.0
        %1406 = vmatprep.subr.mxu0 0.0
        %1407 = vmatpush1.msra.mxu0 0.0
        %1408 = vmatprep.subr.mxu0 0.0
        %1409 = vmatpush1.msra.mxu0 0.0
        %1410 = vmatprep.subr.mxu0 0.0
        %1411 = vmatpush1.msra.mxu0 0.0
        %1412 = vmatprep.subr.mxu0 0.0
        %1413 = vmatpush1.msra.mxu0 0.0
        %1414 = vmatprep.subr.mxu0 0.0
        %1415 = vmatpush1.msra.mxu0 0.0
        %1416 = vmatprep.subr.mxu0 0.0
        %1417 = vmatpush1.msra.mxu0 0.0
        %1418 = vmatprep.subr.mxu0 0.0
        %1419 = vmatpush1.msra.mxu0 0.0
        %1420 = vmatprep.subr.mxu0 0.0
        %1421 = vmatpush1.msra.mxu0 0.0
        %1422 = vmatprep.subr.mxu0 0.0
        %1423 = vmatpush1.msra.mxu0 0.0
        %1424 = vmatprep.subr.mxu0 0.0
        %1425 = vmatpush1.msra.mxu0 0.0
        %1426 = vmatprep.subr.mxu0 0.0
        %1427 = vmatpush1.msra.mxu0 0.0
        %1428 = vmatprep.subr.mxu0 0.0
        %1429 = vmatpush1.msra.mxu0 0.0
        %1430 = vmatprep.subr.mxu0 0.0
        %1431 = vmatpush1.msra.mxu0 0.0
        %1432 = vmatprep.subr.mxu0 0.0
        %1433 = vmatpush1.msra.mxu0 0.0
        %1434 = vmatprep.subr.mxu0 0.0
        %1435 = vmatpush1.msra.mxu0 0.0
        %1436 = vmatprep.mubr.f32.mxu0 0.0
        %1437 = vmatmul.mubr.f32.gmra.mrb[0].mxu0 %v1370
        %v1438 = vpop.f32.mrb[0].mxu0
        %v1439 = vadd.f32 0.0, %v1438
        %v1440 = vpop.f32.mrb[0].mxu0
        %1441 = vdwg.mxu0
        %v1442 = vadd.f32 %v1201, %v1439
        %v1443 = vld [vmem:[%s5] sm:$0x1]
        %v1445 = vlaneseq
        %v1446 = vshrl.u32 %v1445, 7
        %v1447 = vsub.s32 0, %v1446
        %v1448 = vrot.slane %v1443, %v1447
        %v1450 = vadd.f32 %v1442, %v1448
        %v1451 = vadd.f32 %v355, %v1450
        %v1452 = vsel %vm356, %v1451, 0.0
        %1453 = vadd.xlane.f32.xlu0 %v1452
        %v1454 = vpop.xlane.xlu0 %1453
        %v1455 = vmul.f32 %v1454, %v360
        %v1456 = vsub.f32 %v1451, %v1455
        %v1457 = vmul.f32 %v1456, %v1456
        %v1458 = vsel %vm356, %v1457, 0.0
        %1459 = vadd.xlane.f32.xlu0 %v1458
        %v1460 = vpop.xlane.xlu0 %1459
        %v1461 = vmul.f32 %v1460, %v360
        %v1462 = vadd.f32 %v1461, 1e-05
        %v1463 = vrsqrt.pop %v1462
        %v1464 = vmul.f32 %v1456, %v1463
        %v1465 = vld [vmem:[%s6] sm:$0xff]
        %v1466 = vld [vmem:[%s6 + $0x8] sm:$0xff]
        %v1467 = vld [vmem:[%s6 + $0x10] sm:$0xff]
        %v1468 = vld [vmem:[%s6 + $0x18] sm:$0xff]
        %v1469 = vld [vmem:[%s6 + $0x20] sm:$0xff]
        %v1470 = vld [vmem:[%s6 + $0x28] sm:$0xff]
        %v1471 = vld [vmem:[%s6 + $0x30] sm:$0xff]
        %v1472 = vld [vmem:[%s6 + $0x38] sm:$0xff]
        %v1473 = vld [vmem:[%s6 + $0x40] sm:$0xff]
        %v1474 = vld [vmem:[%s6 + $0x48] sm:$0xff]
        %v1475 = vld [vmem:[%s6 + $0x50] sm:$0xff]
        %v1476 = vld [vmem:[%s6 + $0x58] sm:$0xff]
        %v1477 = vld [vmem:[%s6 + $0x60] sm:$0xff]
        %v1478 = vld [vmem:[%s6 + $0x68] sm:$0xff]
        %v1479 = vld [vmem:[%s6 + $0x70] sm:$0xff]
        %v1480 = vld [vmem:[%s6 + $0x78] sm:$0xff]
        %v1481 = vld [vmem:[%s7] sm:$0x3]
        %v1483 = vlaneseq
        %v1484 = vshrl.u32 %v1483, 7
        %v1485 = vsub.s32 0, %v1484
        %v1486 = vrot.slane %v1481, %v1485
        %v1487 = vlaneseq
        %v1488 = vshrl.u32 %v1487, 7
        %v1489 = vsub.s32 1, %v1488
        %v1490 = vrot.slane %v1481, %v1489
        %v1494 = vsel %vm356, %v1464, 0
        %1496 = vmatprep.subr.mxu0 %v1466
        %1497 = vmatpush1.msra.mxu0 %v1465
        %1498 = vmatprep.subr.mxu0 %v1468
        %1499 = vmatpush1.msra.mxu0 %v1467
        %1500 = vmatprep.subr.mxu0 %v1470
        %1501 = vmatpush1.msra.mxu0 %v1469
        %1502 = vmatprep.subr.mxu0 %v1472
        %1503 = vmatpush1.msra.mxu0 %v1471
        %1504 = vmatprep.subr.mxu0 %v1474
        %1505 = vmatpush1.msra.mxu0 %v1473
        %1506 = vmatprep.subr.mxu0 %v1476
        %1507 = vmatpush1.msra.mxu0 %v1475
        %1508 = vmatprep.subr.mxu0 %v1478
        %1509 = vmatpush1.msra.mxu0 %v1477
        %1510 = vmatprep.subr.mxu0 %v1480
        %1511 = vmatpush1.msra.mxu0 %v1479
        %1512 = vmatprep.subr.mxu0 0.0
        %1513 = vmatpush1.msra.mxu0 0.0
        %1514 = vmatprep.subr.mxu0 0.0
        %1515 = vmatpush1.msra.mxu0 0.0
        %1516 = vmatprep.subr.mxu0 0.0
        %1517 = vmatpush1.msra.mxu0 0.0
        %1518 = vmatprep.subr.mxu0 0.0
        %1519 = vmatpush1.msra.mxu0 0.0
        %1520 = vmatprep.subr.mxu0 0.0
        %1521 = vmatpush1.msra.mxu0 0.0
        %1522 = vmatprep.subr.mxu0 0.0
        %1523 = vmatpush1.msra.mxu0 0.0
        %1524 = vmatprep.subr.mxu0 0.0
        %1525 = vmatpush1.msra.mxu0 0.0
        %1526 = vmatprep.subr.mxu0 0.0
        %1527 = vmatpush1.msra.mxu0 0.0
        %1528 = vmatprep.subr.mxu0 0.0
        %1529 = vmatpush1.msra.mxu0 0.0
        %1530 = vmatprep.subr.mxu0 0.0
        %1531 = vmatpush1.msra.mxu0 0.0
        %1532 = vmatprep.subr.mxu0 0.0
        %1533 = vmatpush1.msra.mxu0 0.0
        %1534 = vmatprep.subr.mxu0 0.0
        %1535 = vmatpush1.msra.mxu0 0.0
        %1536 = vmatprep.subr.mxu0 0.0
        %1537 = vmatpush1.msra.mxu0 0.0
        %1538 = vmatprep.subr.mxu0 0.0
        %1539 = vmatpush1.msra.mxu0 0.0
        %1540 = vmatprep.subr.mxu0 0.0
        %1541 = vmatpush1.msra.mxu0 0.0
        %1542 = vmatprep.subr.mxu0 0.0
        %1543 = vmatpush1.msra.mxu0 0.0
        %1544 = vmatprep.subr.mxu0 0.0
        %1545 = vmatpush1.msra.mxu0 0.0
        %1546 = vmatprep.subr.mxu0 0.0
        %1547 = vmatpush1.msra.mxu0 0.0
        %1548 = vmatprep.subr.mxu0 0.0
        %1549 = vmatpush1.msra.mxu0 0.0
        %1550 = vmatprep.subr.mxu0 0.0
        %1551 = vmatpush1.msra.mxu0 0.0
        %1552 = vmatprep.subr.mxu0 0.0
        %1553 = vmatpush1.msra.mxu0 0.0
        %1554 = vmatprep.subr.mxu0 0.0
        %1555 = vmatpush1.msra.mxu0 0.0
        %1556 = vmatprep.subr.mxu0 0.0
        %1557 = vmatpush1.msra.mxu0 0.0
        %1558 = vmatprep.subr.mxu0 0.0
        %1559 = vmatpush1.msra.mxu0 0.0
        %1560 = vmatprep.mubr.f32.mxu0 0.0
        %1561 = vmatmul.mubr.f32.gmra.mrb[0].mxu0 %v1494
        %v1562 = vpop.f32.mrb[0].mxu0
        %v1563 = vadd.f32 %v1486, %v1562
        %v1564 = vpop.f32.mrb[0].mxu0
        %v1565 = vadd.f32 %v1490, %v1564
        %1566 = vdwg.mxu0
        %v1567 = vmax.f32 %v1563, 0.0
        %v1568 = vmax.f32 %v1565, 0.0
        %v1569 = vld [vmem:[%s8] sm:$0xff]
        %v1570 = vld [vmem:[%s8 + $0x8] sm:$0xff]
        %v1571 = vld [vmem:[%s8 + $0x10] sm:$0xff]
        %v1572 = vld [vmem:[%s8 + $0x18] sm:$0xff]
        %v1573 = vld [vmem:[%s8 + $0x20] sm:$0xff]
        %v1574 = vld [vmem:[%s8 + $0x28] sm:$0xff]
        %v1575 = vld [vmem:[%s8 + $0x30] sm:$0xff]
        %v1576 = vld [vmem:[%s8 + $0x38] sm:$0xff]
        %v1577 = vld [vmem:[%s8 + $0x40] sm:$0xff]
        %v1578 = vld [vmem:[%s8 + $0x48] sm:$0xff]
        %v1579 = vld [vmem:[%s8 + $0x50] sm:$0xff]
        %v1580 = vld [vmem:[%s8 + $0x58] sm:$0xff]
        %v1581 = vld [vmem:[%s8 + $0x60] sm:$0xff]
        %v1582 = vld [vmem:[%s8 + $0x68] sm:$0xff]
        %v1583 = vld [vmem:[%s8 + $0x70] sm:$0xff]
        %v1584 = vld [vmem:[%s8 + $0x78] sm:$0xff]
        %v1585 = vld [vmem:[%s8 + $0x80] sm:$0xff]
        %v1586 = vld [vmem:[%s8 + $0x88] sm:$0xff]
        %v1587 = vld [vmem:[%s8 + $0x90] sm:$0xff]
        %v1588 = vld [vmem:[%s8 + $0x98] sm:$0xff]
        %v1589 = vld [vmem:[%s8 + $0xa0] sm:$0xff]
        %v1590 = vld [vmem:[%s8 + $0xa8] sm:$0xff]
        %v1591 = vld [vmem:[%s8 + $0xb0] sm:$0xff]
        %v1592 = vld [vmem:[%s8 + $0xb8] sm:$0xff]
        %v1593 = vld [vmem:[%s8 + $0xc0] sm:$0xff]
        %v1594 = vld [vmem:[%s8 + $0xc8] sm:$0xff]
        %v1595 = vld [vmem:[%s8 + $0xd0] sm:$0xff]
        %v1596 = vld [vmem:[%s8 + $0xd8] sm:$0xff]
        %v1597 = vld [vmem:[%s8 + $0xe0] sm:$0xff]
        %v1598 = vld [vmem:[%s8 + $0xe8] sm:$0xff]
        %v1599 = vld [vmem:[%s8 + $0xf0] sm:$0xff]
        %v1600 = vld [vmem:[%s8 + $0xf8] sm:$0xff]
        %v1601 = vld [vmem:[%s9] sm:$0x1]
        %v1603 = vlaneseq
        %v1604 = vshrl.u32 %v1603, 7
        %v1605 = vsub.s32 0, %v1604
        %v1606 = vrot.slane %v1601, %v1605
        %1608 = vmatprep.subr.mxu0 0.0
        %1609 = vmatpush1.msra.mxu0 %v1569
        %1610 = vmatprep.subr.mxu0 0.0
        %1611 = vmatpush1.msra.mxu0 %v1570
        %1612 = vmatprep.subr.mxu0 0.0
        %1613 = vmatpush1.msra.mxu0 %v1571
        %1614 = vmatprep.subr.mxu0 0.0
        %1615 = vmatpush1.msra.mxu0 %v1572
        %1616 = vmatprep.subr.mxu0 0.0
        %1617 = vmatpush1.msra.mxu0 %v1573
        %1618 = vmatprep.subr.mxu0 0.0
        %1619 = vmatpush1.msra.mxu0 %v1574
        %1620 = vmatprep.subr.mxu0 0.0
        %1621 = vmatpush1.msra.mxu0 %v1575
        %1622 = vmatprep.subr.mxu0 0.0
        %1623 = vmatpush1.msra.mxu0 %v1576
        %1624 = vmatprep.subr.mxu0 0.0
        %1625 = vmatpush1.msra.mxu0 %v1577
        %1626 = vmatprep.subr.mxu0 0.0
        %1627 = vmatpush1.msra.mxu0 %v1578
        %1628 = vmatprep.subr.mxu0 0.0
        %1629 = vmatpush1.msra.mxu0 %v1579
        %1630 = vmatprep.subr.mxu0 0.0
        %1631 = vmatpush1.msra.mxu0 %v1580
        %1632 = vmatprep.subr.mxu0 0.0
        %1633 = vmatpush1.msra.mxu0 %v1581
        %1634 = vmatprep.subr.mxu0 0.0
        %1635 = vmatpush1.msra.mxu0 %v1582
        %1636 = vmatprep.subr.mxu0 0.0
        %1637 = vmatpush1.msra.mxu0 %v1583
        %1638 = vmatprep.subr.mxu0 0.0
        %1639 = vmatpush1.msra.mxu0 %v1584
        %1640 = vmatprep.subr.mxu0 0.0
        %1641 = vmatpush1.msra.mxu0 %v1585
        %1642 = vmatprep.subr.mxu0 0.0
        %1643 = vmatpush1.msra.mxu0 %v1586
        %1644 = vmatprep.subr.mxu0 0.0
        %1645 = vmatpush1.msra.mxu0 %v1587
        %1646 = vmatprep.subr.mxu0 0.0
        %1647 = vmatpush1.msra.mxu0 %v1588
        %1648 = vmatprep.subr.mxu0 0.0
        %1649 = vmatpush1.msra.mxu0 %v1589
        %1650 = vmatprep.subr.mxu0 0.0
        %1651 = vmatpush1.msra.mxu0 %v1590
        %1652 = vmatprep.subr.mxu0 0.0
        %1653 = vmatpush1.msra.mxu0 %v1591
        %1654 = vmatprep.subr.mxu0 0.0
        %1655 = vmatpush1.msra.mxu0 %v1592
        %1656 = vmatprep.subr.mxu0 0.0
        %1657 = vmatpush1.msra.mxu0 %v1593
        %1658 = vmatprep.subr.mxu0 0.0
        %1659 = vmatpush1.msra.mxu0 %v1594
        %1660 = vmatprep.subr.mxu0 0.0
        %1661 = vmatpush1.msra.mxu0 %v1595
        %1662 = vmatprep.subr.mxu0 0.0
        %1663 = vmatpush1.msra.mxu0 %v1596
        %1664 = vmatprep.subr.mxu0 0.0
        %1665 = vmatpush1.msra.mxu0 %v1597
        %1666 = vmatprep.subr.mxu0 0.0
        %1667 = vmatpush1.msra.mxu0 %v1598
        %1668 = vmatprep.subr.mxu0 0.0
        %1669 = vmatpush1.msra.mxu0 %v1599
        %1670 = vmatprep.subr.mxu0 0.0
        %1671 = vmatpush1.msra.mxu0 %v1600
        %1672 = vmatprep.mubr.f32.mxu0 %v1568
        %1673 = vmatmul.mubr.f32.gmra.mrb[0].mxu0 %v1567
        %v1674 = vpop.f32.mrb[0].mxu0
        %v1675 = vadd.f32 %v1606, %v1674
        %v1676 = vpop.f32.mrb[0].mxu0
        %1677 = vdwg.mxu0
        %v1678 = vadd.f32 %v1451, %v1675
        %1679 = vst.msk [vmem:[%s350] sm:$0xff] %vm356, %v1678
        %s1680 = sand.u32 %s247, 1
        %s1681 = scalar_lea.sflag [#allocation3], %s1680
        %s1682 = sand.u32 %s247, 1
        %s1683 = smul.addr %s1682, 8
        %s1684 = scalar_lea.vmem [#allocation2], %s1683
        // Predicated region
        $region61: #{tpu_custom_call.1} parent=59 // pred_check
          %p1685 = pneg %p257
        $region62: #{tpu_custom_call.1} parent=59 // pred_check_branch
          %1687 = sbr.rel (%p1685) target = $region64
        $region63: #{tpu_custom_call.1} parent=59 // pred_region
          %s1689 = ssub.s32 128, 128
          %1690 = vsyncadd %s1681, %s1689
          %s1691 = smul.addr %s24, 128
          %s1692 = scalar_lea.hbm %s10, %s1691
          %s1694 = sshll.u32 %s1684, 4
          %s1695 = int_to_ptr.vmem [resolvable:$true] %s1694
          %1697 = dma.vmem_to_hbm [thread:$0]  %s1695, 128, %s1692, %s1681
        $region64: #{tpu_custom_call.1} parent=59 // pred_fallthru
          _
      $region60: #{tpu_custom_call.1} parent=5 // pred_fallthru
        _
      %p1698 = scmp.le.s32.totalorder 2, %s19
      // Predicated region
      $region65: #{tpu_custom_call.1} parent=5 // pred_check
        %p1699 = pneg %p1698
      $region66: #{tpu_custom_call.1} parent=5 // pred_check_branch
        %1701 = sbr.rel (%p1699) target = $region68
      $region67: #{tpu_custom_call.1} parent=5 // pred_region
        %s1702 = ssub.s32 %s19, 2
        // Predicated region
        $region69: #{tpu_custom_call.1} parent=67 // pred_check
          %p1703 = pneg %p263
        $region70: #{tpu_custom_call.1} parent=67 // pred_check_branch
          %1705 = sbr.rel (%p1703) target = $region72
        $region71: #{tpu_custom_call.1} parent=67 // pred_region
          %s1706 = sand.u32 %s248, 1
          %s1707 = scalar_lea.sflag [#allocation3], %s1706
          %s1708 = sand.u32 %s248, 1
          %s1709 = smul.addr %s1708, 8
          %s1710 = scalar_lea.vmem [#allocation2], %s1709
          %1711 = dma.done %s1707, 128
        $region72: #{tpu_custom_call.1} parent=67 // pred_fallthru
          _
      $region68: #{tpu_custom_call.1} parent=5 // pred_fallthru
        _
    $region6: #{tpu_custom_call.1} parent=1 // loop_footer
      %s23 = sadd.s32 1, %s19
    $region7: #{tpu_custom_call.1} parent=1 // loop_footer_branch
      %18 = sbr.rel target = $region3
    $region8: #{tpu_custom_call.1} parent=1 // loop_exit
      _
    %1712 = vsyncpa [#allocation3], 1
    %s1713 = scalar_lea.sflag [#allocation3], 1
    %1714 = vsyncpa %s1713, 1

</llo_original>
